<compile_context>
chip_gen: v7x
topology: tpu7x:2x2x1
jax: 0.10.0
libtpu: 0.0.40
codegen_flags: <defaults>
</compile_context>

<pallas_src>
import functools

import jax
import jax.numpy as jnp
from jax.experimental import pallas as pl
from jax.experimental.pallas import tpu as pltpu


def vae_kernel(x_ref, eps_ref,
               w1_ref, b1_ref, w2_ref, b2_ref, w3_ref, b3_ref,
               w4_ref, b4_ref, w5_ref, b5_ref, w6_ref, b6_ref,
               xrec_ref, h_ref, *, bf16_tanh):
    def leaky(v):  # nn.LeakyReLU default negative_slope = 0.01 (f32 VPU path)
        return jnp.where(v > 0, v, 0.01 * v)

    def dense(a, w_ref, b_ref, in_dtype=jnp.bfloat16):
        # in_dtype operands on the MXU, f32 accumulation, f32 bias epilogue.
        return jnp.dot(a.astype(in_dtype), w_ref[...],
                       preferred_element_type=jnp.float32) + b_ref[...]

    x = x_ref[...]  # (TB, input_dim) f32; bf16 cast happens inside dense()

    # ---- encoder ----
    h1 = leaky(dense(x, w1_ref, b1_ref))
    h2 = leaky(dense(h1, w2_ref, b2_ref))
    # Encoder head kept in f32 (tiny matmul) for mu/log_var precision; its
    # output lanes are zero-padded to 128 so h_ref is an unmasked full store.
    h = dense(h2, w3_ref, b3_ref, in_dtype=jnp.float32)   # (TB, 128)

    # ---- reparameterize (mu/log_var split kept in-register only) ----
    latent = eps_ref.shape[-1]
    mu = h[:, :latent]
    log_var = h[:, latent:2 * latent]
    std = jnp.exp(0.5 * log_var)
    z = mu + eps_ref[...] * std

    # ---- decoder ----
    d1 = leaky(dense(z, w4_ref, b4_ref))
    d2 = leaky(dense(d1, w5_ref, b5_ref))
    pre = dense(d2, w6_ref, b6_ref)
    if bf16_tanh:
        # v6e/v7x: bf16 EUP halves vreg traffic through the single EUP slot.
        xrec = jnp.tanh(pre.astype(jnp.bfloat16))
    else:
        # v5e and older: no bf16 EUP — keep tanh in f32, cast only at store.
        xrec = jnp.tanh(pre)

    # Lane-dense stores only: bf16 (TB, 1024) and f32 (TB, 128).
    xrec_ref[...] = xrec.astype(xrec_ref.dtype)
    h_ref[...] = h.astype(h_ref.dtype)


def _round_up(a, m):
    return ((a + m - 1) // m) * m


def init_linear(key, fan_in, fan_out):
    """Deterministic PyTorch-style init: U(-1/sqrt(fan_in), 1/sqrt(fan_in)).
    Weight is returned as (in, out) so the kernel does x @ W + b."""
    kw, kb = jax.random.split(key)
    bound = 1.0 / jnp.sqrt(float(fan_in))
    w = jax.random.uniform(kw, (fan_in, fan_out), jnp.float32, -bound, bound)
    b = jax.random.uniform(kb, (1, fan_out), jnp.float32, -bound, bound)
    return w, b


def _pad_lanes(arr, to_cols):
    pad = to_cols - arr.shape[-1]
    if pad > 0:
        arr = jnp.pad(arr, ((0, 0), (0, pad)))
    return arr


def vae_forward(x_nchw, eps, params, *, batch_tile=512):
    B = x_nchw.shape[0]
    input_dim = x_nchw.shape[1] * x_nchw.shape[2] * x_nchw.shape[3]
    latent_dim = eps.shape[-1]
    head_cols = max(128, _round_up(2 * latent_dim, 128))  # padded encoder head

    # Flatten NCHW -> (B, input_dim) (same as x.view(-1, input_dim)); keep f32
    # here — the bf16 cast happens inside the kernel (no extra HBM pass).
    xf = x_nchw.reshape(B, input_dim)

    # Batch tile: multiple of 16 sublanes (bf16 packing), capped at batch_tile.
    tb = min(batch_tile, _round_up(B, 16))
    # If this would give a single grid step but the batch is splittable, halve
    # the tile so the "parallel" batch axis spans both v7x TensorCores.
    if tb >= 32 and _round_up(B, tb) == tb:
        half = _round_up((B + 1) // 2, 16)
        if half < tb:
            tb = half
    padded_b = _round_up(B, tb)
    if padded_b != B:
        xf = jnp.pad(xf, ((0, padded_b - B), (0, 0)))
        eps_in = jnp.pad(eps, ((0, padded_b - B), (0, 0)))
    else:
        eps_in = eps
    grid = (padded_b // tb,)

    # Weights: bf16 + VMEM-resident, except the encoder head (L3), which stays
    # f32 and is zero-padded to 128 output lanes. Biases stay f32 (1, fan_out).
    flat_params = []
    for idx, (w, b) in enumerate(params):
        if idx == 2:
            flat_params.append(_pad_lanes(w.astype(jnp.float32), head_cols))
            flat_params.append(_pad_lanes(b.reshape(1, -1).astype(jnp.float32),
                                          head_cols))
        else:
            flat_params.append(w.astype(jnp.bfloat16))
            flat_params.append(b.reshape(1, -1).astype(jnp.float32))

    batch_spec = lambda cols: pl.BlockSpec((tb, cols), lambda i: (i, 0))
    resident_spec = lambda arr: pl.BlockSpec(arr.shape, lambda i: (0, 0))

    in_specs = (
        [batch_spec(input_dim), batch_spec(latent_dim)]
        + [resident_spec(p) for p in flat_params]
    )
    out_specs = (
        batch_spec(input_dim),   # x_reconstructed (bf16)
        batch_spec(head_cols),   # h = [mu | log_var | zero-pad] (f32)
    )

    # bf16 transcendentals only on chips with a bf16 EUP (v6e / v7x).
    kind = jax.devices()[0].device_kind.lower()
    bf16_tanh = ("v6" in kind) or ("v7" in kind)

    xrec_p, h_p = pl.pallas_call(
        functools.partial(vae_kernel, bf16_tanh=bf16_tanh),
        grid=grid,
        out_shape=(
            jax.ShapeDtypeStruct((padded_b, input_dim), jnp.bfloat16),
            jax.ShapeDtypeStruct((padded_b, head_cols), jnp.float32),
        ),
        in_specs=in_specs,
        out_specs=out_specs,
        compiler_params=pltpu.CompilerParams(
            dimension_semantics=("parallel",),
            vmem_limit_bytes=48 * 1024 * 1024,
        ),
    )(xf, eps_in, *flat_params)

    # Cheap XLA-side slicing: drop pad rows, split mu / log_var from padded h.
    xrec = xrec_p[:B]                              # bf16 (documented tolerance)
    mu = h_p[:B, :latent_dim]
    log_var = h_p[:B, latent_dim:2 * latent_dim]
    return xrec, mu, log_var


if __name__ == "__main__":
    # Small shapes consistent with the module.
    B, C, H, W = 2, 4, 16, 16
    input_dim = C * H * W            # 1024
    hidden_dim = [128, 64]
    latent_dim = 32

    key = jax.random.PRNGKey(0)
    kx, keps, k1, k2, k3, k4, k5, k6 = jax.random.split(key, 8)

    x = jax.random.normal(kx, (B, C, H, W), jnp.float32)
    # TODO(synk): eps is drawn host-side (matching torch.randn_like) instead of
    # in-kernel pltpu.prng_* sampling; it is a tiny per-tile stream.
    eps = jax.random.normal(keps, (B, latent_dim), jnp.float32)

    params = (
        init_linear(k1, input_dim, hidden_dim[0]),       # encoder L1
        init_linear(k2, hidden_dim[0], hidden_dim[1]),   # encoder L2
        init_linear(k3, hidden_dim[1], latent_dim * 2),  # encoder L3 (mu|logvar)
        init_linear(k4, latent_dim, hidden_dim[1]),      # decoder L1
        init_linear(k5, hidden_dim[1], hidden_dim[0]),   # decoder L2
        init_linear(k6, hidden_dim[0], input_dim),       # decoder L3 (+ tanh)
    )

    xrec, mu, log_var = vae_forward(x, eps, params)
    jax.block_until_ready((xrec, mu, log_var))

    assert xrec.shape == (B, input_dim)
    assert mu.shape == (B, latent_dim)
    assert log_var.shape == (B, latent_dim)
    print("KERNEL_OK")
</pallas_src>

<mosaic_0001>
module attributes {stable_mosaic.version = 11 : i64} {
  func.func @vae_kernel(%arg0: i32, %arg1: memref<16x1024xf32, #tpu.memory_space<vmem>>, %arg2: memref<16x32xf32, #tpu.memory_space<vmem>>, %arg3: memref<1024x128xbf16, #tpu.memory_space<vmem>>, %arg4: memref<1x128xf32, #tpu.memory_space<vmem>>, %arg5: memref<128x64xbf16, #tpu.memory_space<vmem>>, %arg6: memref<1x64xf32, #tpu.memory_space<vmem>>, %arg7: memref<64x128xf32, #tpu.memory_space<vmem>>, %arg8: memref<1x128xf32, #tpu.memory_space<vmem>>, %arg9: memref<32x64xbf16, #tpu.memory_space<vmem>>, %arg10: memref<1x64xf32, #tpu.memory_space<vmem>>, %arg11: memref<64x128xbf16, #tpu.memory_space<vmem>>, %arg12: memref<1x128xf32, #tpu.memory_space<vmem>>, %arg13: memref<128x1024xbf16, #tpu.memory_space<vmem>>, %arg14: memref<1x1024xf32, #tpu.memory_space<vmem>>, %arg15: memref<16x1024xbf16, #tpu.memory_space<vmem>>, %arg16: memref<16x128xf32, #tpu.memory_space<vmem>>) attributes {dimension_semantics = [#tpu.dimension_semantics<parallel>], iteration_bounds = array<i64: 1>, scalar_prefetch = 0 : i64, scratch_operands = 0 : i64, tpu.core_type = #tpu.core_type<tc>, window_params = [{transform_indices = @transform_0, window_bounds = array<i64: 16, 1024>}, {transform_indices = @transform_1, window_bounds = array<i64: 16, 32>}, {pipeline_mode = #tpu.pipeline_mode<synchronous>, transform_indices = @transform_2, window_bounds = array<i64: 1024, 128>}, {pipeline_mode = #tpu.pipeline_mode<synchronous>, transform_indices = @transform_3, window_bounds = array<i64: 1, 128>}, {pipeline_mode = #tpu.pipeline_mode<synchronous>, transform_indices = @transform_4, window_bounds = array<i64: 128, 64>}, {pipeline_mode = #tpu.pipeline_mode<synchronous>, transform_indices = @transform_5, window_bounds = array<i64: 1, 64>}, {pipeline_mode = #tpu.pipeline_mode<synchronous>, transform_indices = @transform_6, window_bounds = array<i64: 64, 128>}, {pipeline_mode = #tpu.pipeline_mode<synchronous>, transform_indices = @transform_7, window_bounds = array<i64: 1, 128>}, {pipeline_mode = #tpu.pipeline_mode<synchronous>, transform_indices = @transform_8, window_bounds = array<i64: 32, 64>}, {pipeline_mode = #tpu.pipeline_mode<synchronous>, transform_indices = @transform_9, window_bounds = array<i64: 1, 64>}, {pipeline_mode = #tpu.pipeline_mode<synchronous>, transform_indices = @transform_10, window_bounds = array<i64: 64, 128>}, {pipeline_mode = #tpu.pipeline_mode<synchronous>, transform_indices = @transform_11, window_bounds = array<i64: 1, 128>}, {pipeline_mode = #tpu.pipeline_mode<synchronous>, transform_indices = @transform_12, window_bounds = array<i64: 128, 1024>}, {pipeline_mode = #tpu.pipeline_mode<synchronous>, transform_indices = @transform_13, window_bounds = array<i64: 1, 1024>}, {transform_indices = @transform_14, window_bounds = array<i64: 16, 1024>}, {transform_indices = @transform_15, window_bounds = array<i64: 16, 128>}]} {
    %c0 = arith.constant 0 : index
    %c0_0 = arith.constant 0 : index
    %0 = vector.load %arg1[%c0, %c0_0] : memref<16x1024xf32, #tpu.memory_space<vmem>>, vector<16x1024xf32>
    %1 = arith.truncf %0 : vector<16x1024xf32> to vector<16x1024xbf16>
    %c0_1 = arith.constant 0 : index
    %c0_2 = arith.constant 0 : index
    %2 = vector.load %arg3[%c0_1, %c0_2] : memref<1024x128xbf16, #tpu.memory_space<vmem>>, vector<1024x128xbf16>
    %cst = arith.constant dense<0.000000e+00> : vector<16x128xf32>
    %3 = tpu.matmul %1, %2, %cst {dimension_numbers = #tpu.dot_dimension_numbers<[1], [0], [0], [1], [0, 0, 1, 1], [], []>} : vector<16x1024xbf16>, vector<1024x128xbf16>, vector<16x128xf32> -> vector<16x128xf32>
    %c0_3 = arith.constant 0 : index
    %c0_4 = arith.constant 0 : index
    %4 = vector.load %arg4[%c0_3, %c0_4] : memref<1x128xf32, #tpu.memory_space<vmem>>, vector<1x128xf32>
    %5 = vector.broadcast %4 : vector<1x128xf32> to vector<16x128xf32>
    %6 = arith.addf %3, %5 : vector<16x128xf32>
    %cst_5 = arith.constant 0.000000e+00 : f32
    %7 = vector.broadcast %cst_5 : f32 to vector<16x128xf32>
    %8 = arith.cmpf ogt, %6, %7 : vector<16x128xf32>
    %cst_6 = arith.constant 0.00999999977 : f32
    %9 = vector.broadcast %cst_6 : f32 to vector<16x128xf32>
    %10 = arith.mulf %9, %6 : vector<16x128xf32>
    %11 = arith.select %8, %6, %10 : vector<16x128xi1>, vector<16x128xf32>
    %12 = arith.truncf %11 : vector<16x128xf32> to vector<16x128xbf16>
    %c0_7 = arith.constant 0 : index
    %c0_8 = arith.constant 0 : index
    %13 = vector.load %arg5[%c0_7, %c0_8] : memref<128x64xbf16, #tpu.memory_space<vmem>>, vector<128x64xbf16>
    %cst_9 = arith.constant dense<0.000000e+00> : vector<16x64xf32>
    %14 = tpu.matmul %12, %13, %cst_9 {dimension_numbers = #tpu.dot_dimension_numbers<[1], [0], [0], [1], [0, 0, 1, 1], [], []>} : vector<16x128xbf16>, vector<128x64xbf16>, vector<16x64xf32> -> vector<16x64xf32>
    %c0_10 = arith.constant 0 : index
    %c0_11 = arith.constant 0 : index
    %15 = vector.load %arg6[%c0_10, %c0_11] : memref<1x64xf32, #tpu.memory_space<vmem>>, vector<1x64xf32>
    %16 = vector.broadcast %15 : vector<1x64xf32> to vector<16x64xf32>
    %17 = arith.addf %14, %16 : vector<16x64xf32>
    %cst_12 = arith.constant 0.000000e+00 : f32
    %18 = vector.broadcast %cst_12 : f32 to vector<16x64xf32>
    %19 = arith.cmpf ogt, %17, %18 : vector<16x64xf32>
    %cst_13 = arith.constant 0.00999999977 : f32
    %20 = vector.broadcast %cst_13 : f32 to vector<16x64xf32>
    %21 = arith.mulf %20, %17 : vector<16x64xf32>
    %22 = arith.select %19, %17, %21 : vector<16x64xi1>, vector<16x64xf32>
    %c0_14 = arith.constant 0 : index
    %c0_15 = arith.constant 0 : index
    %23 = vector.load %arg7[%c0_14, %c0_15] : memref<64x128xf32, #tpu.memory_space<vmem>>, vector<64x128xf32>
    %cst_16 = arith.constant dense<0.000000e+00> : vector<16x128xf32>
    %24 = tpu.matmul %22, %23, %cst_16 {dimension_numbers = #tpu.dot_dimension_numbers<[1], [0], [0], [1], [0, 0, 1, 1], [], []>} : vector<16x64xf32>, vector<64x128xf32>, vector<16x128xf32> -> vector<16x128xf32>
    %c0_17 = arith.constant 0 : index
    %c0_18 = arith.constant 0 : index
    %25 = vector.load %arg8[%c0_17, %c0_18] : memref<1x128xf32, #tpu.memory_space<vmem>>, vector<1x128xf32>
    %26 = vector.broadcast %25 : vector<1x128xf32> to vector<16x128xf32>
    %27 = arith.addf %24, %26 : vector<16x128xf32>
    %28 = vector.extract_strided_slice %27 {offsets = [0, 0], sizes = [16, 32], strides = [1, 1]} : vector<16x128xf32> to vector<16x32xf32>
    %29 = vector.extract_strided_slice %27 {offsets = [0, 32], sizes = [16, 32], strides = [1, 1]} : vector<16x128xf32> to vector<16x32xf32>
    %cst_19 = arith.constant 5.000000e-01 : f32
    %30 = vector.broadcast %cst_19 : f32 to vector<16x32xf32>
    %31 = arith.mulf %30, %29 : vector<16x32xf32>
    %32 = math.exp %31 : vector<16x32xf32>
    %c0_20 = arith.constant 0 : index
    %c0_21 = arith.constant 0 : index
    %33 = vector.load %arg2[%c0_20, %c0_21] : memref<16x32xf32, #tpu.memory_space<vmem>>, vector<16x32xf32>
    %34 = arith.mulf %33, %32 : vector<16x32xf32>
    %35 = arith.addf %28, %34 : vector<16x32xf32>
    %36 = arith.truncf %35 : vector<16x32xf32> to vector<16x32xbf16>
    %c0_22 = arith.constant 0 : index
    %c0_23 = arith.constant 0 : index
    %37 = vector.load %arg9[%c0_22, %c0_23] : memref<32x64xbf16, #tpu.memory_space<vmem>>, vector<32x64xbf16>
    %cst_24 = arith.constant dense<0.000000e+00> : vector<16x64xf32>
    %38 = tpu.matmul %36, %37, %cst_24 {dimension_numbers = #tpu.dot_dimension_numbers<[1], [0], [0], [1], [0, 0, 1, 1], [], []>} : vector<16x32xbf16>, vector<32x64xbf16>, vector<16x64xf32> -> vector<16x64xf32>
    %c0_25 = arith.constant 0 : index
    %c0_26 = arith.constant 0 : index
    %39 = vector.load %arg10[%c0_25, %c0_26] : memref<1x64xf32, #tpu.memory_space<vmem>>, vector<1x64xf32>
    %40 = vector.broadcast %39 : vector<1x64xf32> to vector<16x64xf32>
    %41 = arith.addf %38, %40 : vector<16x64xf32>
    %cst_27 = arith.constant 0.000000e+00 : f32
    %42 = vector.broadcast %cst_27 : f32 to vector<16x64xf32>
    %43 = arith.cmpf ogt, %41, %42 : vector<16x64xf32>
    %cst_28 = arith.constant 0.00999999977 : f32
    %44 = vector.broadcast %cst_28 : f32 to vector<16x64xf32>
    %45 = arith.mulf %44, %41 : vector<16x64xf32>
    %46 = arith.select %43, %41, %45 : vector<16x64xi1>, vector<16x64xf32>
    %47 = arith.truncf %46 : vector<16x64xf32> to vector<16x64xbf16>
    %c0_29 = arith.constant 0 : index
    %c0_30 = arith.constant 0 : index
    %48 = vector.load %arg11[%c0_29, %c0_30] : memref<64x128xbf16, #tpu.memory_space<vmem>>, vector<64x128xbf16>
    %cst_31 = arith.constant dense<0.000000e+00> : vector<16x128xf32>
    %49 = tpu.matmul %47, %48, %cst_31 {dimension_numbers = #tpu.dot_dimension_numbers<[1], [0], [0], [1], [0, 0, 1, 1], [], []>} : vector<16x64xbf16>, vector<64x128xbf16>, vector<16x128xf32> -> vector<16x128xf32>
    %c0_32 = arith.constant 0 : index
    %c0_33 = arith.constant 0 : index
    %50 = vector.load %arg12[%c0_32, %c0_33] : memref<1x128xf32, #tpu.memory_space<vmem>>, vector<1x128xf32>
    %51 = vector.broadcast %50 : vector<1x128xf32> to vector<16x128xf32>
    %52 = arith.addf %49, %51 : vector<16x128xf32>
    %cst_34 = arith.constant 0.000000e+00 : f32
    %53 = vector.broadcast %cst_34 : f32 to vector<16x128xf32>
    %54 = arith.cmpf ogt, %52, %53 : vector<16x128xf32>
    %cst_35 = arith.constant 0.00999999977 : f32
    %55 = vector.broadcast %cst_35 : f32 to vector<16x128xf32>
    %56 = arith.mulf %55, %52 : vector<16x128xf32>
    %57 = arith.select %54, %52, %56 : vector<16x128xi1>, vector<16x128xf32>
    %58 = arith.truncf %57 : vector<16x128xf32> to vector<16x128xbf16>
    %c0_36 = arith.constant 0 : index
    %c0_37 = arith.constant 0 : index
    %59 = vector.load %arg13[%c0_36, %c0_37] : memref<128x1024xbf16, #tpu.memory_space<vmem>>, vector<128x1024xbf16>
    %cst_38 = arith.constant dense<0.000000e+00> : vector<16x1024xf32>
    %60 = tpu.matmul %58, %59, %cst_38 {dimension_numbers = #tpu.dot_dimension_numbers<[1], [0], [0], [1], [0, 0, 1, 1], [], []>} : vector<16x128xbf16>, vector<128x1024xbf16>, vector<16x1024xf32> -> vector<16x1024xf32>
    %c0_39 = arith.constant 0 : index
    %c0_40 = arith.constant 0 : index
    %61 = vector.load %arg14[%c0_39, %c0_40] : memref<1x1024xf32, #tpu.memory_space<vmem>>, vector<1x1024xf32>
    %62 = vector.broadcast %61 : vector<1x1024xf32> to vector<16x1024xf32>
    %63 = arith.addf %60, %62 : vector<16x1024xf32>
    %64 = math.tanh %63 : vector<16x1024xf32>
    %65 = arith.truncf %64 : vector<16x1024xf32> to vector<16x1024xbf16>
    %c0_41 = arith.constant 0 : index
    %c0_42 = arith.constant 0 : index
    %66 = vector.load %arg15[%c0_41, %c0_42] : memref<16x1024xbf16, #tpu.memory_space<vmem>>, vector<16x1024xbf16>
    tpu.vector_store %arg15[%c0_41, %c0_42], %65 {strides = array<i32>} : memref<16x1024xbf16, #tpu.memory_space<vmem>>, vector<16x1024xbf16>,
    %c0_43 = arith.constant 0 : index
    %c0_44 = arith.constant 0 : index
    %67 = vector.load %arg16[%c0_43, %c0_44] : memref<16x128xf32, #tpu.memory_space<vmem>>, vector<16x128xf32>
    tpu.vector_store %arg16[%c0_43, %c0_44], %27 {strides = array<i32>} : memref<16x128xf32, #tpu.memory_space<vmem>>, vector<16x128xf32>,
    return
  }
  func.func @transform_0(%arg0: i32) -> (i32, i32) {
    %c0_i32 = arith.constant 0 : i32
    %c0_i32_0 = arith.constant 0 : i32
    return %arg0, %c0_i32 : i32, i32
  }
  func.func @transform_1(%arg0: i32) -> (i32, i32) {
    %c0_i32 = arith.constant 0 : i32
    %c0_i32_0 = arith.constant 0 : i32
    return %arg0, %c0_i32 : i32, i32
  }
  func.func @transform_2(%arg0: i32) -> (i32, i32) {
    %c0_i32 = arith.constant 0 : i32
    %c0_i32_0 = arith.constant 0 : i32
    %c0_i32_1 = arith.constant 0 : i32
    return %c0_i32, %c0_i32_0 : i32, i32
  }
  func.func @transform_3(%arg0: i32) -> (i32, i32) {
    %c0_i32 = arith.constant 0 : i32
    %c0_i32_0 = arith.constant 0 : i32
    %c0_i32_1 = arith.constant 0 : i32
    return %c0_i32, %c0_i32_0 : i32, i32
  }
  func.func @transform_4(%arg0: i32) -> (i32, i32) {
    %c0_i32 = arith.constant 0 : i32
    %c0_i32_0 = arith.constant 0 : i32
    %c0_i32_1 = arith.constant 0 : i32
    return %c0_i32, %c0_i32_0 : i32, i32
  }
  func.func @transform_5(%arg0: i32) -> (i32, i32) {
    %c0_i32 = arith.constant 0 : i32
    %c0_i32_0 = arith.constant 0 : i32
    %c0_i32_1 = arith.constant 0 : i32
    return %c0_i32, %c0_i32_0 : i32, i32
  }
  func.func @transform_6(%arg0: i32) -> (i32, i32) {
    %c0_i32 = arith.constant 0 : i32
    %c0_i32_0 = arith.constant 0 : i32
    %c0_i32_1 = arith.constant 0 : i32
    return %c0_i32, %c0_i32_0 : i32, i32
  }
  func.func @transform_7(%arg0: i32) -> (i32, i32) {
    %c0_i32 = arith.constant 0 : i32
    %c0_i32_0 = arith.constant 0 : i32
    %c0_i32_1 = arith.constant 0 : i32
    return %c0_i32, %c0_i32_0 : i32, i32
  }
  func.func @transform_8(%arg0: i32) -> (i32, i32) {
    %c0_i32 = arith.constant 0 : i32
    %c0_i32_0 = arith.constant 0 : i32
    %c0_i32_1 = arith.constant 0 : i32
    return %c0_i32, %c0_i32_0 : i32, i32
  }
  func.func @transform_9(%arg0: i32) -> (i32, i32) {
    %c0_i32 = arith.constant 0 : i32
    %c0_i32_0 = arith.constant 0 : i32
    %c0_i32_1 = arith.constant 0 : i32
    return %c0_i32, %c0_i32_0 : i32, i32
  }
  func.func @transform_10(%arg0: i32) -> (i32, i32) {
    %c0_i32 = arith.constant 0 : i32
    %c0_i32_0 = arith.constant 0 : i32
    %c0_i32_1 = arith.constant 0 : i32
    return %c0_i32, %c0_i32_0 : i32, i32
  }
  func.func @transform_11(%arg0: i32) -> (i32, i32) {
    %c0_i32 = arith.constant 0 : i32
    %c0_i32_0 = arith.constant 0 : i32
    %c0_i32_1 = arith.constant 0 : i32
    return %c0_i32, %c0_i32_0 : i32, i32
  }
  func.func @transform_12(%arg0: i32) -> (i32, i32) {
    %c0_i32 = arith.constant 0 : i32
    %c0_i32_0 = arith.constant 0 : i32
    %c0_i32_1 = arith.constant 0 : i32
    return %c0_i32, %c0_i32_0 : i32, i32
  }
  func.func @transform_13(%arg0: i32) -> (i32, i32) {
    %c0_i32 = arith.constant 0 : i32
    %c0_i32_0 = arith.constant 0 : i32
    %c0_i32_1 = arith.constant 0 : i32
    return %c0_i32, %c0_i32_0 : i32, i32
  }
  func.func @transform_14(%arg0: i32) -> (i32, i32) {
    %c0_i32 = arith.constant 0 : i32
    %c0_i32_0 = arith.constant 0 : i32
    return %arg0, %c0_i32 : i32, i32
  }
  func.func @transform_15(%arg0: i32) -> (i32, i32) {
    %c0_i32 = arith.constant 0 : i32
    %c0_i32_0 = arith.constant 0 : i32
    return %arg0, %c0_i32 : i32, i32
  }
}

</mosaic_0001>

<llo_original>
// kernel: tpu_custom_call.1
$region0: #{tpu_custom_call.1}
  #allocation0 [shape = 'u32[]', space=smem, size = 0x4, offset = 0x4, fixed_abs, tag = 'smem constant byte address 0x4 - core index']
  #allocation1 [shape = 'u32[144,128]{1,0:T(1,128)}', space=vmem, size = 0x12000, scoped, tag = 'internal scratch']
  %s0 = inlined_call_operand.hbm [shape: f32[16,1024], index: 0, kind: input, shape index: {}]
  %s1 = inlined_call_operand.vmem [shape: f32[16,32], index: 1, kind: input, shape index: {}]
  %s2 = inlined_call_operand.hbm [shape: bf16[1024,128], index: 2, kind: input, shape index: {}]
  %s3 = inlined_call_operand.vmem [shape: f32[1,128], index: 3, kind: input, shape index: {}]
  %s4 = inlined_call_operand.vmem [shape: bf16[128,64], index: 4, kind: input, shape index: {}]
  %s5 = inlined_call_operand.vmem [shape: f32[1,64], index: 5, kind: input, shape index: {}]
  %s6 = inlined_call_operand.vmem [shape: f32[64,128], index: 6, kind: input, shape index: {}]
  %s7 = inlined_call_operand.hbm [shape: f32[1,128], index: 7, kind: input, shape index: {}]
  %s8 = inlined_call_operand.hbm [shape: bf16[32,64], index: 8, kind: input, shape index: {}]
  %s9 = inlined_call_operand.vmem [shape: f32[1,64], index: 9, kind: input, shape index: {}]
  %s10 = inlined_call_operand.vmem [shape: bf16[64,128], index: 10, kind: input, shape index: {}]
  %s11 = inlined_call_operand.vmem [shape: f32[1,128], index: 11, kind: input, shape index: {}]
  %s12 = inlined_call_operand.hbm [shape: bf16[128,1024], index: 12, kind: input, shape index: {}]
  %s13 = inlined_call_operand.vmem [shape: f32[1,1024], index: 13, kind: input, shape index: {}]
  %s14 = inlined_call_operand.hbm [shape: bf16[16,1024], index: 14, kind: output, shape index: {0}]
  %s15 = inlined_call_operand.hbm [shape: f32[16,128], index: 15, kind: output, shape index: {1}]
  %16 = xla_tuple %s14, %s15
  %s17 = sld [smem:[#allocation0]]
  $region94: #{tpu_custom_call.1} parent=0
    _
  %s19 = ssub.s32 1, %s17
  %s20 = scalar_select 0, %s19, %s17
  $region1: #{tpu_custom_call.1} parent=0
    #allocation2 [shape = 'u8[65536]{0}', space=vmem, size = 0x10000, scoped, tag = 'input window, operand 0, single buffered']
    #allocation3 [shape = 's32[1]{0}', space=sflag, size = 0x4, scoped, tag = 'scoped memory for tpu_custom_call.1']
    #allocation4 [shape = 's32[1]{0}', space=sflag, size = 0x4, scoped, tag = 'scoped memory for tpu_custom_call.1']
    #allocation5 [shape = 'u8[262144]{0}', space=vmem, size = 0x40000, scoped, tag = 'input window, operand 2, single buffered']
    #allocation6 [shape = 's32[1]{0}', space=sflag, size = 0x4, scoped, tag = 'scoped memory for tpu_custom_call.1']
    #allocation7 [shape = 'u8[512]{0}', space=vmem, size = 0x400, scoped, tag = 'input window, operand 7, single buffered']
    #allocation8 [shape = 'u8[8192]{0}', space=vmem, size = 0x2000, scoped, tag = 'input window, operand 8, single buffered']
    #allocation9 [shape = 's32[1]{0}', space=sflag, size = 0x4, scoped, tag = 'scoped memory for tpu_custom_call.1']
    #allocation10 [shape = 'u8[262144]{0}', space=vmem, size = 0x40000, scoped, tag = 'input window, operand 12, single buffered']
    #allocation11 [shape = 'u8[32768]{0}', space=vmem, size = 0x8000, scoped, tag = 'output window, operand 0, single buffered']
    #allocation12 [shape = 'u8[8192]{0}', space=vmem, size = 0x2000, scoped, tag = 'output window, operand 1, single buffered']
    #allocation13 [shape = 's32[1]{0}', space=sflag, size = 0x4, scoped, tag = 'scoped memory for tpu_custom_call.1']
    %21 = vsyncpa [#allocation3], 0
    %22 = vsyncpa [#allocation6], 0
    %23 = vsyncpa [#allocation9], 0
    %24 = vsyncpa [#allocation4], 0
    %25 = vsyncpa [#allocation13], 0
    // Predicated region
    $region2: #{tpu_custom_call.1} parent=1 // pred_check
      _
    $region3: #{tpu_custom_call.1} parent=1 // pred_check_branch
      %27 = sbr.rel (0) target = $region5
    $region4: #{tpu_custom_call.1} parent=1 // pred_region
      %s29 = ssub.s32 2048, 2048
      %30 = vsyncadd [#allocation3], %s29
      %s31 = sshll.u32 [#allocation2], 4
      %s32 = int_to_ptr.vmem [resolvable:$true] %s31
      %37 = dma.hbm_to_vmem [thread:$0]  %s0, 2048, %s32, [#allocation3], 1024, 1024, 64
    $region5: #{tpu_custom_call.1} parent=1 // pred_fallthru
      _
    // Predicated region
    $region6: #{tpu_custom_call.1} parent=1 // pred_check
      _
    $region7: #{tpu_custom_call.1} parent=1 // pred_check_branch
      %39 = sbr.rel (0) target = $region9
    $region8: #{tpu_custom_call.1} parent=1 // pred_region
      _
    $region9: #{tpu_custom_call.1} parent=1 // pred_fallthru
      _
    // Predicated region
    $region10: #{tpu_custom_call.1} parent=1 // pred_check
      _
    $region11: #{tpu_custom_call.1} parent=1 // pred_check_branch
      %41 = sbr.rel (0) target = $region13
    $region12: #{tpu_custom_call.1} parent=1 // pred_region
      %s43 = ssub.s32 8192, 8192
      %44 = vsyncadd [#allocation6], %s43
      %s45 = sshll.u32 [#allocation5], 4
      %s46 = int_to_ptr.vmem [resolvable:$true] %s45
      %51 = dma.hbm_to_vmem [thread:$0]  %s2, 8192, %s46, [#allocation6], 64, 64, 4
    $region13: #{tpu_custom_call.1} parent=1 // pred_fallthru
      _
    // Predicated region
    $region14: #{tpu_custom_call.1} parent=1 // pred_check
      _
    $region15: #{tpu_custom_call.1} parent=1 // pred_check_branch
      %53 = sbr.rel (0) target = $region17
    $region16: #{tpu_custom_call.1} parent=1 // pred_region
      _
    $region17: #{tpu_custom_call.1} parent=1 // pred_fallthru
      _
    // Predicated region
    $region18: #{tpu_custom_call.1} parent=1 // pred_check
      _
    $region19: #{tpu_custom_call.1} parent=1 // pred_check_branch
      %55 = sbr.rel (0) target = $region21
    $region20: #{tpu_custom_call.1} parent=1 // pred_region
      _
    $region21: #{tpu_custom_call.1} parent=1 // pred_fallthru
      _
    // Predicated region
    $region22: #{tpu_custom_call.1} parent=1 // pred_check
      _
    $region23: #{tpu_custom_call.1} parent=1 // pred_check_branch
      %57 = sbr.rel (0) target = $region25
    $region24: #{tpu_custom_call.1} parent=1 // pred_region
      _
    $region25: #{tpu_custom_call.1} parent=1 // pred_fallthru
      _
    // Predicated region
    $region26: #{tpu_custom_call.1} parent=1 // pred_check
      _
    $region27: #{tpu_custom_call.1} parent=1 // pred_check_branch
      %59 = sbr.rel (0) target = $region29
    $region28: #{tpu_custom_call.1} parent=1 // pred_region
      _
    $region29: #{tpu_custom_call.1} parent=1 // pred_fallthru
      _
    // Predicated region
    $region30: #{tpu_custom_call.1} parent=1 // pred_check
      _
    $region31: #{tpu_custom_call.1} parent=1 // pred_check_branch
      %61 = sbr.rel (0) target = $region33
    $region32: #{tpu_custom_call.1} parent=1 // pred_region
      %s63 = ssub.s32 16, 16
      %64 = vsyncadd [#allocation6], %s63
      %s66 = sshll.u32 [#allocation7], 4
      %s67 = int_to_ptr.vmem [resolvable:$true] %s66
      %69 = dma.hbm_to_vmem [thread:$0]  %s7, 16, %s67, [#allocation6]
    $region33: #{tpu_custom_call.1} parent=1 // pred_fallthru
      _
    // Predicated region
    $region34: #{tpu_custom_call.1} parent=1 // pred_check
      _
    $region35: #{tpu_custom_call.1} parent=1 // pred_check_branch
      %71 = sbr.rel (0) target = $region37
    $region36: #{tpu_custom_call.1} parent=1 // pred_region
      %s73 = ssub.s32 256, 256
      %74 = vsyncadd [#allocation9], %s73
      %s75 = sshll.u32 [#allocation8], 4
      %s76 = int_to_ptr.vmem [resolvable:$true] %s75
      %81 = dma.hbm_to_vmem [thread:$0]  %s8, 256, %s76, [#allocation9], 64, 64, 4
    $region37: #{tpu_custom_call.1} parent=1 // pred_fallthru
      _
    // Predicated region
    $region38: #{tpu_custom_call.1} parent=1 // pred_check
      _
    $region39: #{tpu_custom_call.1} parent=1 // pred_check_branch
      %83 = sbr.rel (0) target = $region41
    $region40: #{tpu_custom_call.1} parent=1 // pred_region
      _
    $region41: #{tpu_custom_call.1} parent=1 // pred_fallthru
      _
    // Predicated region
    $region42: #{tpu_custom_call.1} parent=1 // pred_check
      _
    $region43: #{tpu_custom_call.1} parent=1 // pred_check_branch
      %85 = sbr.rel (0) target = $region45
    $region44: #{tpu_custom_call.1} parent=1 // pred_region
      _
    $region45: #{tpu_custom_call.1} parent=1 // pred_fallthru
      _
    // Predicated region
    $region46: #{tpu_custom_call.1} parent=1 // pred_check
      _
    $region47: #{tpu_custom_call.1} parent=1 // pred_check_branch
      %87 = sbr.rel (0) target = $region49
    $region48: #{tpu_custom_call.1} parent=1 // pred_region
      _
    $region49: #{tpu_custom_call.1} parent=1 // pred_fallthru
      _
    // Predicated region
    $region50: #{tpu_custom_call.1} parent=1 // pred_check
      _
    $region51: #{tpu_custom_call.1} parent=1 // pred_check_branch
      %89 = sbr.rel (0) target = $region53
    $region52: #{tpu_custom_call.1} parent=1 // pred_region
      %s91 = ssub.s32 8192, 8192
      %92 = vsyncadd [#allocation9], %s91
      %s93 = sshll.u32 [#allocation10], 4
      %s94 = int_to_ptr.vmem [resolvable:$true] %s93
      %99 = dma.hbm_to_vmem [thread:$0]  %s12, 8192, %s94, [#allocation9], 512, 512, 32
    $region53: #{tpu_custom_call.1} parent=1 // pred_fallthru
      _
    // Predicated region
    $region54: #{tpu_custom_call.1} parent=1 // pred_check
      _
    $region55: #{tpu_custom_call.1} parent=1 // pred_check_branch
      %101 = sbr.rel (0) target = $region57
    $region56: #{tpu_custom_call.1} parent=1 // pred_region
      _
    $region57: #{tpu_custom_call.1} parent=1 // pred_fallthru
      _
    // Predicated region
    $region58: #{tpu_custom_call.1} parent=1 // pred_check
      _
    $region59: #{tpu_custom_call.1} parent=1 // pred_check_branch
      %103 = sbr.rel (0) target = $region61
    $region60: #{tpu_custom_call.1} parent=1 // pred_region
      %104 = dma.done [#allocation3], 2048
    $region61: #{tpu_custom_call.1} parent=1 // pred_fallthru
      _
    // Predicated region
    $region62: #{tpu_custom_call.1} parent=1 // pred_check
      _
    $region63: #{tpu_custom_call.1} parent=1 // pred_check_branch
      %106 = sbr.rel (0) target = $region65
    $region64: #{tpu_custom_call.1} parent=1 // pred_region
      %107 = dma.done [#allocation6], 8192
    $region65: #{tpu_custom_call.1} parent=1 // pred_fallthru
      _
    // Predicated region
    $region66: #{tpu_custom_call.1} parent=1 // pred_check
      _
    $region67: #{tpu_custom_call.1} parent=1 // pred_check_branch
      %109 = sbr.rel (0) target = $region69
    $region68: #{tpu_custom_call.1} parent=1 // pred_region
      %110 = dma.done [#allocation6], 16
    $region69: #{tpu_custom_call.1} parent=1 // pred_fallthru
      _
    // Predicated region
    $region70: #{tpu_custom_call.1} parent=1 // pred_check
      _
    $region71: #{tpu_custom_call.1} parent=1 // pred_check_branch
      %112 = sbr.rel (0) target = $region73
    $region72: #{tpu_custom_call.1} parent=1 // pred_region
      %113 = dma.done [#allocation9], 256
    $region73: #{tpu_custom_call.1} parent=1 // pred_fallthru
      _
    // Predicated region
    $region74: #{tpu_custom_call.1} parent=1 // pred_check
      _
    $region75: #{tpu_custom_call.1} parent=1 // pred_check_branch
      %115 = sbr.rel (0) target = $region77
    $region76: #{tpu_custom_call.1} parent=1 // pred_region
      %116 = dma.done [#allocation9], 8192
    $region77: #{tpu_custom_call.1} parent=1 // pred_fallthru
      _
    %v118 = vld [vmem:[#allocation2] sm:$0xff]
    %v119 = vld [vmem:[#allocation2 + $0x8] sm:$0xff]
    %v120 = vld [vmem:[#allocation2 + $0x10] sm:$0xff]
    %v121 = vld [vmem:[#allocation2 + $0x18] sm:$0xff]
    %v122 = vld [vmem:[#allocation2 + $0x20] sm:$0xff]
    %v123 = vld [vmem:[#allocation2 + $0x28] sm:$0xff]
    %v124 = vld [vmem:[#allocation2 + $0x30] sm:$0xff]
    %v125 = vld [vmem:[#allocation2 + $0x38] sm:$0xff]
    %v126 = vld [vmem:[#allocation2 + $0x40] sm:$0xff]
    %v127 = vld [vmem:[#allocation2 + $0x48] sm:$0xff]
    %v128 = vld [vmem:[#allocation2 + $0x50] sm:$0xff]
    %v129 = vld [vmem:[#allocation2 + $0x58] sm:$0xff]
    %v130 = vld [vmem:[#allocation2 + $0x60] sm:$0xff]
    %v131 = vld [vmem:[#allocation2 + $0x68] sm:$0xff]
    %v132 = vld [vmem:[#allocation2 + $0x70] sm:$0xff]
    %v133 = vld [vmem:[#allocation2 + $0x78] sm:$0xff]
    %v134 = vpack.c.bf16 %v126, %v118
    %v135 = vpack.c.bf16 %v127, %v119
    %v136 = vpack.c.bf16 %v128, %v120
    %v137 = vpack.c.bf16 %v129, %v121
    %v138 = vpack.c.bf16 %v130, %v122
    %v139 = vpack.c.bf16 %v131, %v123
    %v140 = vpack.c.bf16 %v132, %v124
    %v141 = vpack.c.bf16 %v133, %v125
    %v142 = vld [vmem:[#allocation5] sm:$0xf]
    %v143 = vld [vmem:[#allocation5 + $0x4] sm:$0xf]
    %v144 = vld [vmem:[#allocation5 + $0x8] sm:$0xf]
    %v145 = vld [vmem:[#allocation5 + $0xc] sm:$0xf]
    %v146 = vld [vmem:[#allocation5 + $0x10] sm:$0xf]
    %v147 = vld [vmem:[#allocation5 + $0x14] sm:$0xf]
    %v148 = vld [vmem:[#allocation5 + $0x18] sm:$0xf]
    %v149 = vld [vmem:[#allocation5 + $0x1c] sm:$0xf]
    %v150 = vld [vmem:[#allocation5 + $0x20] sm:$0xf]
    %v151 = vld [vmem:[#allocation5 + $0x24] sm:$0xf]
    %v152 = vld [vmem:[#allocation5 + $0x28] sm:$0xf]
    %v153 = vld [vmem:[#allocation5 + $0x2c] sm:$0xf]
    %v154 = vld [vmem:[#allocation5 + $0x30] sm:$0xf]
    %v155 = vld [vmem:[#allocation5 + $0x34] sm:$0xf]
    %v156 = vld [vmem:[#allocation5 + $0x38] sm:$0xf]
    %v157 = vld [vmem:[#allocation5 + $0x3c] sm:$0xf]
    %v158 = vld [vmem:[#allocation5 + $0x40] sm:$0xf]
    %v159 = vld [vmem:[#allocation5 + $0x44] sm:$0xf]
    %v160 = vld [vmem:[#allocation5 + $0x48] sm:$0xf]
    %v161 = vld [vmem:[#allocation5 + $0x4c] sm:$0xf]
    %v162 = vld [vmem:[#allocation5 + $0x50] sm:$0xf]
    %v163 = vld [vmem:[#allocation5 + $0x54] sm:$0xf]
    %v164 = vld [vmem:[#allocation5 + $0x58] sm:$0xf]
    %v165 = vld [vmem:[#allocation5 + $0x5c] sm:$0xf]
    %v166 = vld [vmem:[#allocation5 + $0x60] sm:$0xf]
    %v167 = vld [vmem:[#allocation5 + $0x64] sm:$0xf]
    %v168 = vld [vmem:[#allocation5 + $0x68] sm:$0xf]
    %v169 = vld [vmem:[#allocation5 + $0x6c] sm:$0xf]
    %v170 = vld [vmem:[#allocation5 + $0x70] sm:$0xf]
    %v171 = vld [vmem:[#allocation5 + $0x74] sm:$0xf]
    %v172 = vld [vmem:[#allocation5 + $0x78] sm:$0xf]
    %v173 = vld [vmem:[#allocation5 + $0x7c] sm:$0xf]
    %v174 = vld [vmem:[#allocation5 + $0x80] sm:$0xf]
    %v175 = vld [vmem:[#allocation5 + $0x84] sm:$0xf]
    %v176 = vld [vmem:[#allocation5 + $0x88] sm:$0xf]
    %v177 = vld [vmem:[#allocation5 + $0x8c] sm:$0xf]
    %v178 = vld [vmem:[#allocation5 + $0x90] sm:$0xf]
    %v179 = vld [vmem:[#allocation5 + $0x94] sm:$0xf]
    %v180 = vld [vmem:[#allocation5 + $0x98] sm:$0xf]
    %v181 = vld [vmem:[#allocation5 + $0x9c] sm:$0xf]
    %v182 = vld [vmem:[#allocation5 + $0xa0] sm:$0xf]
    %v183 = vld [vmem:[#allocation5 + $0xa4] sm:$0xf]
    %v184 = vld [vmem:[#allocation5 + $0xa8] sm:$0xf]
    %v185 = vld [vmem:[#allocation5 + $0xac] sm:$0xf]
    %v186 = vld [vmem:[#allocation5 + $0xb0] sm:$0xf]
    %v187 = vld [vmem:[#allocation5 + $0xb4] sm:$0xf]
    %v188 = vld [vmem:[#allocation5 + $0xb8] sm:$0xf]
    %v189 = vld [vmem:[#allocation5 + $0xbc] sm:$0xf]
    %v190 = vld [vmem:[#allocation5 + $0xc0] sm:$0xf]
    %v191 = vld [vmem:[#allocation5 + $0xc4] sm:$0xf]
    %v192 = vld [vmem:[#allocation5 + $0xc8] sm:$0xf]
    %v193 = vld [vmem:[#allocation5 + $0xcc] sm:$0xf]
    %v194 = vld [vmem:[#allocation5 + $0xd0] sm:$0xf]
    %v195 = vld [vmem:[#allocation5 + $0xd4] sm:$0xf]
    %v196 = vld [vmem:[#allocation5 + $0xd8] sm:$0xf]
    %v197 = vld [vmem:[#allocation5 + $0xdc] sm:$0xf]
    %v198 = vld [vmem:[#allocation5 + $0xe0] sm:$0xf]
    %v199 = vld [vmem:[#allocation5 + $0xe4] sm:$0xf]
    %v200 = vld [vmem:[#allocation5 + $0xe8] sm:$0xf]
    %v201 = vld [vmem:[#allocation5 + $0xec] sm:$0xf]
    %v202 = vld [vmem:[#allocation5 + $0xf0] sm:$0xf]
    %v203 = vld [vmem:[#allocation5 + $0xf4] sm:$0xf]
    %v204 = vld [vmem:[#allocation5 + $0xf8] sm:$0xf]
    %v205 = vld [vmem:[#allocation5 + $0xfc] sm:$0xf]
    %v206 = vld [vmem:[#allocation5 + $0x100] sm:$0xf]
    %v207 = vld [vmem:[#allocation5 + $0x104] sm:$0xf]
    %v208 = vld [vmem:[#allocation5 + $0x108] sm:$0xf]
    %v209 = vld [vmem:[#allocation5 + $0x10c] sm:$0xf]
    %v210 = vld [vmem:[#allocation5 + $0x110] sm:$0xf]
    %v211 = vld [vmem:[#allocation5 + $0x114] sm:$0xf]
    %v212 = vld [vmem:[#allocation5 + $0x118] sm:$0xf]
    %v213 = vld [vmem:[#allocation5 + $0x11c] sm:$0xf]
    %v214 = vld [vmem:[#allocation5 + $0x120] sm:$0xf]
    %v215 = vld [vmem:[#allocation5 + $0x124] sm:$0xf]
    %v216 = vld [vmem:[#allocation5 + $0x128] sm:$0xf]
    %v217 = vld [vmem:[#allocation5 + $0x12c] sm:$0xf]
    %v218 = vld [vmem:[#allocation5 + $0x130] sm:$0xf]
    %v219 = vld [vmem:[#allocation5 + $0x134] sm:$0xf]
    %v220 = vld [vmem:[#allocation5 + $0x138] sm:$0xf]
    %v221 = vld [vmem:[#allocation5 + $0x13c] sm:$0xf]
    %v222 = vld [vmem:[#allocation5 + $0x140] sm:$0xf]
    %v223 = vld [vmem:[#allocation5 + $0x144] sm:$0xf]
    %v224 = vld [vmem:[#allocation5 + $0x148] sm:$0xf]
    %v225 = vld [vmem:[#allocation5 + $0x14c] sm:$0xf]
    %v226 = vld [vmem:[#allocation5 + $0x150] sm:$0xf]
    %v227 = vld [vmem:[#allocation5 + $0x154] sm:$0xf]
    %v228 = vld [vmem:[#allocation5 + $0x158] sm:$0xf]
    %v229 = vld [vmem:[#allocation5 + $0x15c] sm:$0xf]
    %v230 = vld [vmem:[#allocation5 + $0x160] sm:$0xf]
    %v231 = vld [vmem:[#allocation5 + $0x164] sm:$0xf]
    %v232 = vld [vmem:[#allocation5 + $0x168] sm:$0xf]
    %v233 = vld [vmem:[#allocation5 + $0x16c] sm:$0xf]
    %v234 = vld [vmem:[#allocation5 + $0x170] sm:$0xf]
    %v235 = vld [vmem:[#allocation5 + $0x174] sm:$0xf]
    %v236 = vld [vmem:[#allocation5 + $0x178] sm:$0xf]
    %v237 = vld [vmem:[#allocation5 + $0x17c] sm:$0xf]
    %v238 = vld [vmem:[#allocation5 + $0x180] sm:$0xf]
    %v239 = vld [vmem:[#allocation5 + $0x184] sm:$0xf]
    %v240 = vld [vmem:[#allocation5 + $0x188] sm:$0xf]
    %v241 = vld [vmem:[#allocation5 + $0x18c] sm:$0xf]
    %v242 = vld [vmem:[#allocation5 + $0x190] sm:$0xf]
    %v243 = vld [vmem:[#allocation5 + $0x194] sm:$0xf]
    %v244 = vld [vmem:[#allocation5 + $0x198] sm:$0xf]
    %v245 = vld [vmem:[#allocation5 + $0x19c] sm:$0xf]
    %v246 = vld [vmem:[#allocation5 + $0x1a0] sm:$0xf]
    %v247 = vld [vmem:[#allocation5 + $0x1a4] sm:$0xf]
    %v248 = vld [vmem:[#allocation5 + $0x1a8] sm:$0xf]
    %v249 = vld [vmem:[#allocation5 + $0x1ac] sm:$0xf]
    %v250 = vld [vmem:[#allocation5 + $0x1b0] sm:$0xf]
    %v251 = vld [vmem:[#allocation5 + $0x1b4] sm:$0xf]
    %v252 = vld [vmem:[#allocation5 + $0x1b8] sm:$0xf]
    %v253 = vld [vmem:[#allocation5 + $0x1bc] sm:$0xf]
    %v254 = vld [vmem:[#allocation5 + $0x1c0] sm:$0xf]
    %v255 = vld [vmem:[#allocation5 + $0x1c4] sm:$0xf]
    %v256 = vld [vmem:[#allocation5 + $0x1c8] sm:$0xf]
    %v257 = vld [vmem:[#allocation5 + $0x1cc] sm:$0xf]
    %v258 = vld [vmem:[#allocation5 + $0x1d0] sm:$0xf]
    %v259 = vld [vmem:[#allocation5 + $0x1d4] sm:$0xf]
    %v260 = vld [vmem:[#allocation5 + $0x1d8] sm:$0xf]
    %v261 = vld [vmem:[#allocation5 + $0x1dc] sm:$0xf]
    %v262 = vld [vmem:[#allocation5 + $0x1e0] sm:$0xf]
    %v263 = vld [vmem:[#allocation5 + $0x1e4] sm:$0xf]
    %v264 = vld [vmem:[#allocation5 + $0x1e8] sm:$0xf]
    %v265 = vld [vmem:[#allocation5 + $0x1ec] sm:$0xf]
    %v266 = vld [vmem:[#allocation5 + $0x1f0] sm:$0xf]
    %v267 = vld [vmem:[#allocation5 + $0x1f4] sm:$0xf]
    %v268 = vld [vmem:[#allocation5 + $0x1f8] sm:$0xf]
    %v269 = vld [vmem:[#allocation5 + $0x1fc] sm:$0xf]
    %v270 = vld [vmem:[%s3] sm:$0x1]
    %v272 = vlaneseq
    %v273 = vshrl.u32 %v272, 7
    %v274 = vsub.s32 0, %v273
    %v275 = vrot.slane %v270, %v274
    %v405 = vunpack.c.l.b16 %v142
    %v406 = vunpack.c.l.b16 %v143
    %v407 = vunpack.c.l.b16 %v144
    %v408 = vunpack.c.l.b16 %v145
    %v409 = vunpack.c.l.b16 %v146
    %v410 = vunpack.c.l.b16 %v147
    %v411 = vunpack.c.l.b16 %v148
    %v412 = vunpack.c.l.b16 %v149
    %v413 = vunpack.c.l.b16 %v150
    %v414 = vunpack.c.l.b16 %v151
    %v415 = vunpack.c.l.b16 %v152
    %v416 = vunpack.c.l.b16 %v153
    %v417 = vunpack.c.l.b16 %v154
    %v418 = vunpack.c.l.b16 %v155
    %v419 = vunpack.c.l.b16 %v156
    %v420 = vunpack.c.l.b16 %v157
    %v421 = vunpack.c.l.b16 %v158
    %v422 = vunpack.c.l.b16 %v159
    %v423 = vunpack.c.l.b16 %v160
    %v424 = vunpack.c.l.b16 %v161
    %v425 = vunpack.c.l.b16 %v162
    %v426 = vunpack.c.l.b16 %v163
    %v427 = vunpack.c.l.b16 %v164
    %v428 = vunpack.c.l.b16 %v165
    %v429 = vunpack.c.l.b16 %v166
    %v430 = vunpack.c.l.b16 %v167
    %v431 = vunpack.c.l.b16 %v168
    %v432 = vunpack.c.l.b16 %v169
    %v433 = vunpack.c.l.b16 %v170
    %v434 = vunpack.c.l.b16 %v171
    %v435 = vunpack.c.l.b16 %v172
    %v436 = vunpack.c.l.b16 %v173
    %v437 = vunpack.c.l.b16 %v174
    %v438 = vunpack.c.l.b16 %v175
    %v439 = vunpack.c.l.b16 %v176
    %v440 = vunpack.c.l.b16 %v177
    %v441 = vunpack.c.l.b16 %v178
    %v442 = vunpack.c.l.b16 %v179
    %v443 = vunpack.c.l.b16 %v180
    %v444 = vunpack.c.l.b16 %v181
    %v445 = vunpack.c.l.b16 %v182
    %v446 = vunpack.c.l.b16 %v183
    %v447 = vunpack.c.l.b16 %v184
    %v448 = vunpack.c.l.b16 %v185
    %v449 = vunpack.c.l.b16 %v186
    %v450 = vunpack.c.l.b16 %v187
    %v451 = vunpack.c.l.b16 %v188
    %v452 = vunpack.c.l.b16 %v189
    %v453 = vunpack.c.l.b16 %v190
    %v454 = vunpack.c.l.b16 %v191
    %v455 = vunpack.c.l.b16 %v192
    %v456 = vunpack.c.l.b16 %v193
    %v457 = vunpack.c.l.b16 %v194
    %v458 = vunpack.c.l.b16 %v195
    %v459 = vunpack.c.l.b16 %v196
    %v460 = vunpack.c.l.b16 %v197
    %v461 = vunpack.c.l.b16 %v198
    %v462 = vunpack.c.l.b16 %v199
    %v463 = vunpack.c.l.b16 %v200
    %v464 = vunpack.c.l.b16 %v201
    %v465 = vunpack.c.l.b16 %v202
    %v466 = vunpack.c.l.b16 %v203
    %v467 = vunpack.c.l.b16 %v204
    %v468 = vunpack.c.l.b16 %v205
    %v469 = vunpack.c.l.b16 %v206
    %v470 = vunpack.c.l.b16 %v207
    %v471 = vunpack.c.l.b16 %v208
    %v472 = vunpack.c.l.b16 %v209
    %v473 = vunpack.c.l.b16 %v210
    %v474 = vunpack.c.l.b16 %v211
    %v475 = vunpack.c.l.b16 %v212
    %v476 = vunpack.c.l.b16 %v213
    %v477 = vunpack.c.l.b16 %v214
    %v478 = vunpack.c.l.b16 %v215
    %v479 = vunpack.c.l.b16 %v216
    %v480 = vunpack.c.l.b16 %v217
    %v481 = vunpack.c.l.b16 %v218
    %v482 = vunpack.c.l.b16 %v219
    %v483 = vunpack.c.l.b16 %v220
    %v484 = vunpack.c.l.b16 %v221
    %v485 = vunpack.c.l.b16 %v222
    %v486 = vunpack.c.l.b16 %v223
    %v487 = vunpack.c.l.b16 %v224
    %v488 = vunpack.c.l.b16 %v225
    %v489 = vunpack.c.l.b16 %v226
    %v490 = vunpack.c.l.b16 %v227
    %v491 = vunpack.c.l.b16 %v228
    %v492 = vunpack.c.l.b16 %v229
    %v493 = vunpack.c.l.b16 %v230
    %v494 = vunpack.c.l.b16 %v231
    %v495 = vunpack.c.l.b16 %v232
    %v496 = vunpack.c.l.b16 %v233
    %v497 = vunpack.c.l.b16 %v234
    %v498 = vunpack.c.l.b16 %v235
    %v499 = vunpack.c.l.b16 %v236
    %v500 = vunpack.c.l.b16 %v237
    %v501 = vunpack.c.l.b16 %v238
    %v502 = vunpack.c.l.b16 %v239
    %v503 = vunpack.c.l.b16 %v240
    %v504 = vunpack.c.l.b16 %v241
    %v505 = vunpack.c.l.b16 %v242
    %v506 = vunpack.c.l.b16 %v243
    %v507 = vunpack.c.l.b16 %v244
    %v508 = vunpack.c.l.b16 %v245
    %v509 = vunpack.c.l.b16 %v246
    %v510 = vunpack.c.l.b16 %v247
    %v511 = vunpack.c.l.b16 %v248
    %v512 = vunpack.c.l.b16 %v249
    %v513 = vunpack.c.l.b16 %v250
    %v514 = vunpack.c.l.b16 %v251
    %v515 = vunpack.c.l.b16 %v252
    %v516 = vunpack.c.l.b16 %v253
    %v517 = vunpack.c.l.b16 %v254
    %v518 = vunpack.c.l.b16 %v255
    %v519 = vunpack.c.l.b16 %v256
    %v520 = vunpack.c.l.b16 %v257
    %v521 = vunpack.c.l.b16 %v258
    %v522 = vunpack.c.l.b16 %v259
    %v523 = vunpack.c.l.b16 %v260
    %v524 = vunpack.c.l.b16 %v261
    %v525 = vunpack.c.l.b16 %v262
    %v526 = vunpack.c.l.b16 %v263
    %v527 = vunpack.c.l.b16 %v264
    %v528 = vunpack.c.l.b16 %v265
    %v529 = vunpack.c.l.b16 %v266
    %v530 = vunpack.c.l.b16 %v267
    %v531 = vunpack.c.l.b16 %v268
    %v532 = vunpack.c.l.b16 %v269
    %v533 = vpack.c.b16 %v406, %v405
    %v534 = vpack.c.b16 %v408, %v407
    %v535 = vpack.c.b16 %v410, %v409
    %v536 = vpack.c.b16 %v412, %v411
    %v537 = vpack.c.b16 %v414, %v413
    %v538 = vpack.c.b16 %v416, %v415
    %v539 = vpack.c.b16 %v418, %v417
    %v540 = vpack.c.b16 %v420, %v419
    %v541 = vpack.c.b16 %v422, %v421
    %v542 = vpack.c.b16 %v424, %v423
    %v543 = vpack.c.b16 %v426, %v425
    %v544 = vpack.c.b16 %v428, %v427
    %v545 = vpack.c.b16 %v430, %v429
    %v546 = vpack.c.b16 %v432, %v431
    %v547 = vpack.c.b16 %v434, %v433
    %v548 = vpack.c.b16 %v436, %v435
    %v549 = vpack.c.b16 %v438, %v437
    %v550 = vpack.c.b16 %v440, %v439
    %v551 = vpack.c.b16 %v442, %v441
    %v552 = vpack.c.b16 %v444, %v443
    %v553 = vpack.c.b16 %v446, %v445
    %v554 = vpack.c.b16 %v448, %v447
    %v555 = vpack.c.b16 %v450, %v449
    %v556 = vpack.c.b16 %v452, %v451
    %v557 = vpack.c.b16 %v454, %v453
    %v558 = vpack.c.b16 %v456, %v455
    %v559 = vpack.c.b16 %v458, %v457
    %v560 = vpack.c.b16 %v460, %v459
    %v561 = vpack.c.b16 %v462, %v461
    %v562 = vpack.c.b16 %v464, %v463
    %v563 = vpack.c.b16 %v466, %v465
    %v564 = vpack.c.b16 %v468, %v467
    %v565 = vpack.c.b16 %v470, %v469
    %v566 = vpack.c.b16 %v472, %v471
    %v567 = vpack.c.b16 %v474, %v473
    %v568 = vpack.c.b16 %v476, %v475
    %v569 = vpack.c.b16 %v478, %v477
    %v570 = vpack.c.b16 %v480, %v479
    %v571 = vpack.c.b16 %v482, %v481
    %v572 = vpack.c.b16 %v484, %v483
    %v573 = vpack.c.b16 %v486, %v485
    %v574 = vpack.c.b16 %v488, %v487
    %v575 = vpack.c.b16 %v490, %v489
    %v576 = vpack.c.b16 %v492, %v491
    %v577 = vpack.c.b16 %v494, %v493
    %v578 = vpack.c.b16 %v496, %v495
    %v579 = vpack.c.b16 %v498, %v497
    %v580 = vpack.c.b16 %v500, %v499
    %v581 = vpack.c.b16 %v502, %v501
    %v582 = vpack.c.b16 %v504, %v503
    %v583 = vpack.c.b16 %v506, %v505
    %v584 = vpack.c.b16 %v508, %v507
    %v585 = vpack.c.b16 %v510, %v509
    %v586 = vpack.c.b16 %v512, %v511
    %v587 = vpack.c.b16 %v514, %v513
    %v588 = vpack.c.b16 %v516, %v515
    %v589 = vpack.c.b16 %v518, %v517
    %v590 = vpack.c.b16 %v520, %v519
    %v591 = vpack.c.b16 %v522, %v521
    %v592 = vpack.c.b16 %v524, %v523
    %v593 = vpack.c.b16 %v526, %v525
    %v594 = vpack.c.b16 %v528, %v527
    %v595 = vpack.c.b16 %v530, %v529
    %v596 = vpack.c.b16 %v532, %v531
    %661 = vmatprep.subr.bf16.mxu0 0
    %662 = vmatpush1.bf16.msra.mxu0 %v533
    %663 = vmatprep.subr.bf16.mxu0 0
    %664 = vmatpush1.bf16.msra.mxu0 %v534
    %665 = vmatprep.subr.bf16.mxu0 0
    %666 = vmatpush1.bf16.msra.mxu0 %v535
    %667 = vmatprep.subr.bf16.mxu0 0
    %668 = vmatpush1.bf16.msra.mxu0 %v536
    %669 = vmatprep.subr.bf16.mxu0 0
    %670 = vmatpush1.bf16.msra.mxu0 %v537
    %671 = vmatprep.subr.bf16.mxu0 0
    %672 = vmatpush1.bf16.msra.mxu0 %v538
    %673 = vmatprep.subr.bf16.mxu0 0
    %674 = vmatpush1.bf16.msra.mxu0 %v539
    %675 = vmatprep.subr.bf16.mxu0 0
    %676 = vmatpush1.bf16.msra.mxu0 %v540
    %677 = vmatprep.subr.bf16.mxu0 0
    %678 = vmatpush1.bf16.msra.mxu0 %v541
    %679 = vmatprep.subr.bf16.mxu0 0
    %680 = vmatpush1.bf16.msra.mxu0 %v542
    %681 = vmatprep.subr.bf16.mxu0 0
    %682 = vmatpush1.bf16.msra.mxu0 %v543
    %683 = vmatprep.subr.bf16.mxu0 0
    %684 = vmatpush1.bf16.msra.mxu0 %v544
    %685 = vmatprep.subr.bf16.mxu0 0
    %686 = vmatpush1.bf16.msra.mxu0 %v545
    %687 = vmatprep.subr.bf16.mxu0 0
    %688 = vmatpush1.bf16.msra.mxu0 %v546
    %689 = vmatprep.subr.bf16.mxu0 0
    %690 = vmatpush1.bf16.msra.mxu0 %v547
    %691 = vmatprep.subr.bf16.mxu0 0
    %692 = vmatpush1.bf16.msra.mxu0 %v548
    %693 = vmatprep.mubr.bf16.mxu0 %v135
    %694 = vmatmul.mubr.bf16.gmra.mrb[0].mxu0 %v134
    %v695 = vpop.f32.mrb[0].mxu0
    %v696 = vadd.f32 %v275, %v695
    %v697 = vpop.f32.mrb[0].mxu0
    %v698 = vpop.f32.mrb[0].mxu0
    %v699 = vadd.f32 %v275, %v698
    %v700 = vpop.f32.mrb[0].mxu0
    %701 = vdwg.mxu0
    %702 = vmatprep.subr.bf16.mxu0 0
    %703 = vmatpush1.bf16.msra.mxu0 %v549
    %704 = vmatprep.subr.bf16.mxu0 0
    %705 = vmatpush1.bf16.msra.mxu0 %v550
    %706 = vmatprep.subr.bf16.mxu0 0
    %707 = vmatpush1.bf16.msra.mxu0 %v551
    %708 = vmatprep.subr.bf16.mxu0 0
    %709 = vmatpush1.bf16.msra.mxu0 %v552
    %710 = vmatprep.subr.bf16.mxu0 0
    %711 = vmatpush1.bf16.msra.mxu0 %v553
    %712 = vmatprep.subr.bf16.mxu0 0
    %713 = vmatpush1.bf16.msra.mxu0 %v554
    %714 = vmatprep.subr.bf16.mxu0 0
    %715 = vmatpush1.bf16.msra.mxu0 %v555
    %716 = vmatprep.subr.bf16.mxu0 0
    %717 = vmatpush1.bf16.msra.mxu0 %v556
    %718 = vmatprep.subr.bf16.mxu0 0
    %719 = vmatpush1.bf16.msra.mxu0 %v557
    %720 = vmatprep.subr.bf16.mxu0 0
    %721 = vmatpush1.bf16.msra.mxu0 %v558
    %722 = vmatprep.subr.bf16.mxu0 0
    %723 = vmatpush1.bf16.msra.mxu0 %v559
    %724 = vmatprep.subr.bf16.mxu0 0
    %725 = vmatpush1.bf16.msra.mxu0 %v560
    %726 = vmatprep.subr.bf16.mxu0 0
    %727 = vmatpush1.bf16.msra.mxu0 %v561
    %728 = vmatprep.subr.bf16.mxu0 0
    %729 = vmatpush1.bf16.msra.mxu0 %v562
    %730 = vmatprep.subr.bf16.mxu0 0
    %731 = vmatpush1.bf16.msra.mxu0 %v563
    %732 = vmatprep.subr.bf16.mxu0 0
    %733 = vmatpush1.bf16.msra.mxu0 %v564
    %734 = vmatprep.mubr.bf16.mxu0 %v137
    %735 = vmatmul.mubr.bf16.gmra.mrb[0].mxu0 %v136
    %v736 = vpop.f32.mrb[0].mxu0
    %v737 = vadd.f32 %v696, %v736
    %v738 = vpop.f32.mrb[0].mxu0
    %v739 = vpop.f32.mrb[0].mxu0
    %v740 = vadd.f32 %v699, %v739
    %v741 = vpop.f32.mrb[0].mxu0
    %742 = vdwg.mxu0
    %743 = vmatprep.subr.bf16.mxu0 0
    %744 = vmatpush1.bf16.msra.mxu0 %v565
    %745 = vmatprep.subr.bf16.mxu0 0
    %746 = vmatpush1.bf16.msra.mxu0 %v566
    %747 = vmatprep.subr.bf16.mxu0 0
    %748 = vmatpush1.bf16.msra.mxu0 %v567
    %749 = vmatprep.subr.bf16.mxu0 0
    %750 = vmatpush1.bf16.msra.mxu0 %v568
    %751 = vmatprep.subr.bf16.mxu0 0
    %752 = vmatpush1.bf16.msra.mxu0 %v569
    %753 = vmatprep.subr.bf16.mxu0 0
    %754 = vmatpush1.bf16.msra.mxu0 %v570
    %755 = vmatprep.subr.bf16.mxu0 0
    %756 = vmatpush1.bf16.msra.mxu0 %v571
    %757 = vmatprep.subr.bf16.mxu0 0
    %758 = vmatpush1.bf16.msra.mxu0 %v572
    %759 = vmatprep.subr.bf16.mxu0 0
    %760 = vmatpush1.bf16.msra.mxu0 %v573
    %761 = vmatprep.subr.bf16.mxu0 0
    %762 = vmatpush1.bf16.msra.mxu0 %v574
    %763 = vmatprep.subr.bf16.mxu0 0
    %764 = vmatpush1.bf16.msra.mxu0 %v575
    %765 = vmatprep.subr.bf16.mxu0 0
    %766 = vmatpush1.bf16.msra.mxu0 %v576
    %767 = vmatprep.subr.bf16.mxu0 0
    %768 = vmatpush1.bf16.msra.mxu0 %v577
    %769 = vmatprep.subr.bf16.mxu0 0
    %770 = vmatpush1.bf16.msra.mxu0 %v578
    %771 = vmatprep.subr.bf16.mxu0 0
    %772 = vmatpush1.bf16.msra.mxu0 %v579
    %773 = vmatprep.subr.bf16.mxu0 0
    %774 = vmatpush1.bf16.msra.mxu0 %v580
    %775 = vmatprep.mubr.bf16.mxu0 %v139
    %776 = vmatmul.mubr.bf16.gmra.mrb[0].mxu0 %v138
    %v777 = vpop.f32.mrb[0].mxu0
    %v778 = vadd.f32 %v737, %v777
    %v779 = vpop.f32.mrb[0].mxu0
    %v780 = vpop.f32.mrb[0].mxu0
    %v781 = vadd.f32 %v740, %v780
    %v782 = vpop.f32.mrb[0].mxu0
    %783 = vdwg.mxu0
    %784 = vmatprep.subr.bf16.mxu0 0
    %785 = vmatpush1.bf16.msra.mxu0 %v581
    %786 = vmatprep.subr.bf16.mxu0 0
    %787 = vmatpush1.bf16.msra.mxu0 %v582
    %788 = vmatprep.subr.bf16.mxu0 0
    %789 = vmatpush1.bf16.msra.mxu0 %v583
    %790 = vmatprep.subr.bf16.mxu0 0
    %791 = vmatpush1.bf16.msra.mxu0 %v584
    %792 = vmatprep.subr.bf16.mxu0 0
    %793 = vmatpush1.bf16.msra.mxu0 %v585
    %794 = vmatprep.subr.bf16.mxu0 0
    %795 = vmatpush1.bf16.msra.mxu0 %v586
    %796 = vmatprep.subr.bf16.mxu0 0
    %797 = vmatpush1.bf16.msra.mxu0 %v587
    %798 = vmatprep.subr.bf16.mxu0 0
    %799 = vmatpush1.bf16.msra.mxu0 %v588
    %800 = vmatprep.subr.bf16.mxu0 0
    %801 = vmatpush1.bf16.msra.mxu0 %v589
    %802 = vmatprep.subr.bf16.mxu0 0
    %803 = vmatpush1.bf16.msra.mxu0 %v590
    %804 = vmatprep.subr.bf16.mxu0 0
    %805 = vmatpush1.bf16.msra.mxu0 %v591
    %806 = vmatprep.subr.bf16.mxu0 0
    %807 = vmatpush1.bf16.msra.mxu0 %v592
    %808 = vmatprep.subr.bf16.mxu0 0
    %809 = vmatpush1.bf16.msra.mxu0 %v593
    %810 = vmatprep.subr.bf16.mxu0 0
    %811 = vmatpush1.bf16.msra.mxu0 %v594
    %812 = vmatprep.subr.bf16.mxu0 0
    %813 = vmatpush1.bf16.msra.mxu0 %v595
    %814 = vmatprep.subr.bf16.mxu0 0
    %815 = vmatpush1.bf16.msra.mxu0 %v596
    %816 = vmatprep.mubr.bf16.mxu0 %v141
    %817 = vmatmul.mubr.bf16.gmra.mrb[0].mxu0 %v140
    %v818 = vpop.f32.mrb[0].mxu0
    %v819 = vadd.f32 %v778, %v818
    %v820 = vpop.f32.mrb[0].mxu0
    %v821 = vpop.f32.mrb[0].mxu0
    %v822 = vadd.f32 %v781, %v821
    %v823 = vpop.f32.mrb[0].mxu0
    %824 = vdwg.mxu0
    %vm825 = vcmp.gt.f32.partialorder %v819, 0.0
    %vm826 = vcmp.gt.f32.partialorder %v822, 0.0
    %v827 = vmul.f32 %v819, 0.01
    %v828 = vmul.f32 %v822, 0.01
    %v829 = vsel %vm825, %v819, %v827
    %v830 = vsel %vm826, %v822, %v828
    %v831 = vpack.c.bf16 %v830, %v829
    %v832 = vld [vmem:[%s4] sm:$0xf]
    %v833 = vld [vmem:[%s4 + $0x4] sm:$0xf]
    %v834 = vld [vmem:[%s4 + $0x8] sm:$0xf]
    %v835 = vld [vmem:[%s4 + $0xc] sm:$0xf]
    %v836 = vld [vmem:[%s4 + $0x10] sm:$0xf]
    %v837 = vld [vmem:[%s4 + $0x14] sm:$0xf]
    %v838 = vld [vmem:[%s4 + $0x18] sm:$0xf]
    %v839 = vld [vmem:[%s4 + $0x1c] sm:$0xf]
    %v840 = vld [vmem:[%s4 + $0x20] sm:$0xf]
    %v841 = vld [vmem:[%s4 + $0x24] sm:$0xf]
    %v842 = vld [vmem:[%s4 + $0x28] sm:$0xf]
    %v843 = vld [vmem:[%s4 + $0x2c] sm:$0xf]
    %v844 = vld [vmem:[%s4 + $0x30] sm:$0xf]
    %v845 = vld [vmem:[%s4 + $0x34] sm:$0xf]
    %v846 = vld [vmem:[%s4 + $0x38] sm:$0xf]
    %v847 = vld [vmem:[%s4 + $0x3c] sm:$0xf]
    %v848 = vld [vmem:[%s5] sm:$0x1]
    %v850 = vlaneseq
    %v851 = vshrl.u32 %v850, 7
    %v852 = vsub.s32 0, %v851
    %v853 = vrot.slane %v848, %v852
    %v871 = vunpack.c.l.b16 %v832
    %v872 = vunpack.c.l.b16 %v833
    %v873 = vunpack.c.l.b16 %v834
    %v874 = vunpack.c.l.b16 %v835
    %v875 = vunpack.c.l.b16 %v836
    %v876 = vunpack.c.l.b16 %v837
    %v877 = vunpack.c.l.b16 %v838
    %v878 = vunpack.c.l.b16 %v839
    %v879 = vunpack.c.l.b16 %v840
    %v880 = vunpack.c.l.b16 %v841
    %v881 = vunpack.c.l.b16 %v842
    %v882 = vunpack.c.l.b16 %v843
    %v883 = vunpack.c.l.b16 %v844
    %v884 = vunpack.c.l.b16 %v845
    %v885 = vunpack.c.l.b16 %v846
    %v886 = vunpack.c.l.b16 %v847
    %v887 = vpack.c.b16 %v872, %v871
    %v888 = vpack.c.b16 %v874, %v873
    %v889 = vpack.c.b16 %v876, %v875
    %v890 = vpack.c.b16 %v878, %v877
    %v891 = vpack.c.b16 %v880, %v879
    %v892 = vpack.c.b16 %v882, %v881
    %v893 = vpack.c.b16 %v884, %v883
    %v894 = vpack.c.b16 %v886, %v885
    %903 = vmatprep.subr.bf16.mxu0 0
    %904 = vmatpush1.bf16.msra.mxu0 %v887
    %905 = vmatprep.subr.bf16.mxu0 0
    %906 = vmatpush1.bf16.msra.mxu0 %v888
    %907 = vmatprep.subr.bf16.mxu0 0
    %908 = vmatpush1.bf16.msra.mxu0 %v889
    %909 = vmatprep.subr.bf16.mxu0 0
    %910 = vmatpush1.bf16.msra.mxu0 %v890
    %911 = vmatprep.subr.bf16.mxu0 0
    %912 = vmatpush1.bf16.msra.mxu0 %v891
    %913 = vmatprep.subr.bf16.mxu0 0
    %914 = vmatpush1.bf16.msra.mxu0 %v892
    %915 = vmatprep.subr.bf16.mxu0 0
    %916 = vmatpush1.bf16.msra.mxu0 %v893
    %917 = vmatprep.subr.bf16.mxu0 0
    %918 = vmatpush1.bf16.msra.mxu0 %v894
    %919 = vmatprep.subr.bf16.mxu0 0
    %920 = vmatpush1.bf16.msra.mxu0 0
    %921 = vmatprep.subr.bf16.mxu0 0
    %922 = vmatpush1.bf16.msra.mxu0 0
    %923 = vmatprep.subr.bf16.mxu0 0
    %924 = vmatpush1.bf16.msra.mxu0 0
    %925 = vmatprep.subr.bf16.mxu0 0
    %926 = vmatpush1.bf16.msra.mxu0 0
    %927 = vmatprep.subr.bf16.mxu0 0
    %928 = vmatpush1.bf16.msra.mxu0 0
    %929 = vmatprep.subr.bf16.mxu0 0
    %930 = vmatpush1.bf16.msra.mxu0 0
    %931 = vmatprep.subr.bf16.mxu0 0
    %932 = vmatpush1.bf16.msra.mxu0 0
    %933 = vmatprep.subr.bf16.mxu0 0
    %934 = vmatpush1.bf16.msra.mxu0 0
    %935 = vmatprep.mubr.bf16.mxu0 0
    %936 = vmatmul.mubr.bf16.gmra.mrb[0].mxu0 %v831
    %v937 = vpop.f32.mrb[0].mxu0
    %v938 = vadd.f32 %v853, %v937
    %v939 = vpop.f32.mrb[0].mxu0
    %v940 = vpop.f32.mrb[0].mxu0
    %v941 = vadd.f32 %v853, %v940
    %v942 = vpop.f32.mrb[0].mxu0
    %943 = vdwg.mxu0
    %vm944 = vcmp.gt.f32.partialorder %v938, 0.0
    %vm945 = vcmp.gt.f32.partialorder %v941, 0.0
    %v946 = vmul.f32 %v938, 0.01
    %v947 = vmul.f32 %v941, 0.01
    %v948 = vsel %vm944, %v938, %v946
    %v949 = vsel %vm945, %v941, %v947
    %v950 = vld [vmem:[%s6] sm:$0xff]
    %v951 = vld [vmem:[%s6 + $0x8] sm:$0xff]
    %v952 = vld [vmem:[%s6 + $0x10] sm:$0xff]
    %v953 = vld [vmem:[%s6 + $0x18] sm:$0xff]
    %v954 = vld [vmem:[%s6 + $0x20] sm:$0xff]
    %v955 = vld [vmem:[%s6 + $0x28] sm:$0xff]
    %v956 = vld [vmem:[%s6 + $0x30] sm:$0xff]
    %v957 = vld [vmem:[%s6 + $0x38] sm:$0xff]
    %v958 = vld [vmem:[#allocation7] sm:$0x1]
    %v960 = vlaneseq
    %v961 = vshrl.u32 %v960, 7
    %v962 = vsub.s32 0, %v961
    %v963 = vrot.slane %v958, %v962
    %vm965 = vcmask 523264
    %v967 = vsel %vm965, %v948, 0
    %v970 = vsel %vm965, %v949, 0
    %972 = vmatprep.subr.mxu0 0.0
    %973 = vmatpush1.msra.mxu0 %v950
    %974 = vmatprep.subr.mxu0 0.0
    %975 = vmatpush1.msra.mxu0 %v951
    %976 = vmatprep.subr.mxu0 0.0
    %977 = vmatpush1.msra.mxu0 %v952
    %978 = vmatprep.subr.mxu0 0.0
    %979 = vmatpush1.msra.mxu0 %v953
    %980 = vmatprep.subr.mxu0 0.0
    %981 = vmatpush1.msra.mxu0 %v954
    %982 = vmatprep.subr.mxu0 0.0
    %983 = vmatpush1.msra.mxu0 %v955
    %984 = vmatprep.subr.mxu0 0.0
    %985 = vmatpush1.msra.mxu0 %v956
    %986 = vmatprep.subr.mxu0 0.0
    %987 = vmatpush1.msra.mxu0 %v957
    %988 = vmatprep.subr.mxu0 0.0
    %989 = vmatpush1.msra.mxu0 0.0
    %990 = vmatprep.subr.mxu0 0.0
    %991 = vmatpush1.msra.mxu0 0.0
    %992 = vmatprep.subr.mxu0 0.0
    %993 = vmatpush1.msra.mxu0 0.0
    %994 = vmatprep.subr.mxu0 0.0
    %995 = vmatpush1.msra.mxu0 0.0
    %996 = vmatprep.subr.mxu0 0.0
    %997 = vmatpush1.msra.mxu0 0.0
    %998 = vmatprep.subr.mxu0 0.0
    %999 = vmatpush1.msra.mxu0 0.0
    %1000 = vmatprep.subr.mxu0 0.0
    %1001 = vmatpush1.msra.mxu0 0.0
    %1002 = vmatprep.subr.mxu0 0.0
    %1003 = vmatpush1.msra.mxu0 0.0
    %1004 = vmatprep.subr.mxu0 0.0
    %1005 = vmatpush1.msra.mxu0 0.0
    %1006 = vmatprep.subr.mxu0 0.0
    %1007 = vmatpush1.msra.mxu0 0.0
    %1008 = vmatprep.subr.mxu0 0.0
    %1009 = vmatpush1.msra.mxu0 0.0
    %1010 = vmatprep.subr.mxu0 0.0
    %1011 = vmatpush1.msra.mxu0 0.0
    %1012 = vmatprep.subr.mxu0 0.0
    %1013 = vmatpush1.msra.mxu0 0.0
    %1014 = vmatprep.subr.mxu0 0.0
    %1015 = vmatpush1.msra.mxu0 0.0
    %1016 = vmatprep.subr.mxu0 0.0
    %1017 = vmatpush1.msra.mxu0 0.0
    %1018 = vmatprep.subr.mxu0 0.0
    %1019 = vmatpush1.msra.mxu0 0.0
    %1020 = vmatprep.subr.mxu0 0.0
    %1021 = vmatpush1.msra.mxu0 0.0
    %1022 = vmatprep.subr.mxu0 0.0
    %1023 = vmatpush1.msra.mxu0 0.0
    %1024 = vmatprep.subr.mxu0 0.0
    %1025 = vmatpush1.msra.mxu0 0.0
    %1026 = vmatprep.subr.mxu0 0.0
    %1027 = vmatpush1.msra.mxu0 0.0
    %1028 = vmatprep.subr.mxu0 0.0
    %1029 = vmatpush1.msra.mxu0 0.0
    %1030 = vmatprep.subr.mxu0 0.0
    %1031 = vmatpush1.msra.mxu0 0.0
    %1032 = vmatprep.subr.mxu0 0.0
    %1033 = vmatpush1.msra.mxu0 0.0
    %1034 = vmatprep.subr.mxu0 0.0
    %1035 = vmatpush1.msra.mxu0 0.0
    %1036 = vmatprep.mubr.f32.mxu0 0.0
    %1037 = vmatmul.mubr.f32.gmra.mrb[0].mxu0 %v967
    %v1038 = vpop.f32.mrb[0].mxu0
    %v1039 = vadd.f32 %v963, %v1038
    %v1040 = vpop.f32.mrb[0].mxu0
    %1041 = vmatprep.mubr.f32.mxu0 0.0
    %1042 = vmatmul.mubr.f32.gmra.mrb[0].mxu0 %v970
    %v1043 = vpop.f32.mrb[0].mxu0
    %v1044 = vadd.f32 %v963, %v1043
    %v1045 = vpop.f32.mrb[0].mxu0
    %1046 = vdwg.mxu0
    %v1047 = vmul.f32 %v1039, 0.5
    %v1048 = vmul.f32 %v1044, 0.5
    %v1049 = vmul.f32 %v1047, 1.442695
    %v1050 = vpow.pop %v1049
    %v1051 = vmul.f32 %v1048, 1.442695
    %v1052 = vpow.pop %v1051
    %v1053 = vld [vmem:[%s1] sm:$0xff]
    %v1054 = vld [vmem:[%s1 + $0x8] sm:$0xff]
    %1057 = vrot.lane.b32.xlu0 %v1050, 96
    %v1058 = vpop.permute.xlu0 %1057
    %1059 = vrot.lane.b32.xlu0 %v1052, 96
    %v1060 = vpop.permute.xlu0 %1059
    %v1063 = vmul.f32 %v1053, %v1058
    %v1064 = vmul.f32 %v1054, %v1060
    %v1065 = vadd.f32 %v1039, %v1063
    %v1066 = vadd.f32 %v1044, %v1064
    %v1067 = vpack.c.bf16 %v1066, %v1065
    %v1068 = vld [vmem:[#allocation8] sm:$0xf]
    %v1069 = vld [vmem:[#allocation8 + $0x4] sm:$0xf]
    %v1070 = vld [vmem:[#allocation8 + $0x8] sm:$0xf]
    %v1071 = vld [vmem:[#allocation8 + $0xc] sm:$0xf]
    %v1072 = vld [vmem:[%s9] sm:$0x1]
    %v1074 = vlaneseq
    %v1075 = vshrl.u32 %v1074, 7
    %v1076 = vsub.s32 0, %v1075
    %v1077 = vrot.slane %v1072, %v1076
    %v1083 = vunpack.c.l.b16 %v1068
    %v1084 = vunpack.c.l.b16 %v1069
    %v1085 = vunpack.c.l.b16 %v1070
    %v1086 = vunpack.c.l.b16 %v1071
    %v1087 = vpack.c.b16 %v1084, %v1083
    %v1088 = vpack.c.b16 %v1086, %v1085
    %vm1091 = vcmask 261120
    %v1093 = vsel %vm1091, %v1067, 0
    %1095 = vmatprep.subr.bf16.mxu0 0
    %1096 = vmatpush1.bf16.msra.mxu0 %v1087
    %1097 = vmatprep.subr.bf16.mxu0 0
    %1098 = vmatpush1.bf16.msra.mxu0 %v1088
    %1099 = vmatprep.subr.bf16.mxu0 0
    %1100 = vmatpush1.bf16.msra.mxu0 0
    %1101 = vmatprep.subr.bf16.mxu0 0
    %1102 = vmatpush1.bf16.msra.mxu0 0
    %1103 = vmatprep.subr.bf16.mxu0 0
    %1104 = vmatpush1.bf16.msra.mxu0 0
    %1105 = vmatprep.subr.bf16.mxu0 0
    %1106 = vmatpush1.bf16.msra.mxu0 0
    %1107 = vmatprep.subr.bf16.mxu0 0
    %1108 = vmatpush1.bf16.msra.mxu0 0
    %1109 = vmatprep.subr.bf16.mxu0 0
    %1110 = vmatpush1.bf16.msra.mxu0 0
    %1111 = vmatprep.subr.bf16.mxu0 0
    %1112 = vmatpush1.bf16.msra.mxu0 0
    %1113 = vmatprep.subr.bf16.mxu0 0
    %1114 = vmatpush1.bf16.msra.mxu0 0
    %1115 = vmatprep.subr.bf16.mxu0 0
    %1116 = vmatpush1.bf16.msra.mxu0 0
    %1117 = vmatprep.subr.bf16.mxu0 0
    %1118 = vmatpush1.bf16.msra.mxu0 0
    %1119 = vmatprep.subr.bf16.mxu0 0
    %1120 = vmatpush1.bf16.msra.mxu0 0
    %1121 = vmatprep.subr.bf16.mxu0 0
    %1122 = vmatpush1.bf16.msra.mxu0 0
    %1123 = vmatprep.subr.bf16.mxu0 0
    %1124 = vmatpush1.bf16.msra.mxu0 0
    %1125 = vmatprep.subr.bf16.mxu0 0
    %1126 = vmatpush1.bf16.msra.mxu0 0
    %1127 = vmatprep.mubr.bf16.mxu0 0
    %1128 = vmatmul.mubr.bf16.gmra.mrb[0].mxu0 %v1093
    %v1129 = vpop.f32.mrb[0].mxu0
    %v1130 = vadd.f32 %v1077, %v1129
    %v1131 = vpop.f32.mrb[0].mxu0
    %v1132 = vpop.f32.mrb[0].mxu0
    %v1133 = vadd.f32 %v1077, %v1132
    %v1134 = vpop.f32.mrb[0].mxu0
    %1135 = vdwg.mxu0
    %vm1136 = vcmp.gt.f32.partialorder %v1130, 0.0
    %vm1137 = vcmp.gt.f32.partialorder %v1133, 0.0
    %v1138 = vmul.f32 %v1130, 0.01
    %v1139 = vmul.f32 %v1133, 0.01
    %v1140 = vsel %vm1136, %v1130, %v1138
    %v1141 = vsel %vm1137, %v1133, %v1139
    %v1142 = vpack.c.bf16 %v1141, %v1140
    %v1143 = vld [vmem:[%s10] sm:$0xf]
    %v1144 = vld [vmem:[%s10 + $0x4] sm:$0xf]
    %v1145 = vld [vmem:[%s10 + $0x8] sm:$0xf]
    %v1146 = vld [vmem:[%s10 + $0xc] sm:$0xf]
    %v1147 = vld [vmem:[%s10 + $0x10] sm:$0xf]
    %v1148 = vld [vmem:[%s10 + $0x14] sm:$0xf]
    %v1149 = vld [vmem:[%s10 + $0x18] sm:$0xf]
    %v1150 = vld [vmem:[%s10 + $0x1c] sm:$0xf]
    %v1151 = vld [vmem:[%s11] sm:$0x1]
    %v1153 = vlaneseq
    %v1154 = vshrl.u32 %v1153, 7
    %v1155 = vsub.s32 0, %v1154
    %v1156 = vrot.slane %v1151, %v1155
    %v1166 = vunpack.c.l.b16 %v1143
    %v1167 = vunpack.c.l.b16 %v1144
    %v1168 = vunpack.c.l.b16 %v1145
    %v1169 = vunpack.c.l.b16 %v1146
    %v1170 = vunpack.c.l.b16 %v1147
    %v1171 = vunpack.c.l.b16 %v1148
    %v1172 = vunpack.c.l.b16 %v1149
    %v1173 = vunpack.c.l.b16 %v1150
    %v1174 = vpack.c.b16 %v1167, %v1166
    %v1175 = vpack.c.b16 %v1169, %v1168
    %v1176 = vpack.c.b16 %v1171, %v1170
    %v1177 = vpack.c.b16 %v1173, %v1172
    %v1183 = vsel %vm965, %v1142, 0
    %1185 = vmatprep.subr.bf16.mxu0 0
    %1186 = vmatpush1.bf16.msra.mxu0 %v1174
    %1187 = vmatprep.subr.bf16.mxu0 0
    %1188 = vmatpush1.bf16.msra.mxu0 %v1175
    %1189 = vmatprep.subr.bf16.mxu0 0
    %1190 = vmatpush1.bf16.msra.mxu0 %v1176
    %1191 = vmatprep.subr.bf16.mxu0 0
    %1192 = vmatpush1.bf16.msra.mxu0 %v1177
    %1193 = vmatprep.subr.bf16.mxu0 0
    %1194 = vmatpush1.bf16.msra.mxu0 0
    %1195 = vmatprep.subr.bf16.mxu0 0
    %1196 = vmatpush1.bf16.msra.mxu0 0
    %1197 = vmatprep.subr.bf16.mxu0 0
    %1198 = vmatpush1.bf16.msra.mxu0 0
    %1199 = vmatprep.subr.bf16.mxu0 0
    %1200 = vmatpush1.bf16.msra.mxu0 0
    %1201 = vmatprep.subr.bf16.mxu0 0
    %1202 = vmatpush1.bf16.msra.mxu0 0
    %1203 = vmatprep.subr.bf16.mxu0 0
    %1204 = vmatpush1.bf16.msra.mxu0 0
    %1205 = vmatprep.subr.bf16.mxu0 0
    %1206 = vmatpush1.bf16.msra.mxu0 0
    %1207 = vmatprep.subr.bf16.mxu0 0
    %1208 = vmatpush1.bf16.msra.mxu0 0
    %1209 = vmatprep.subr.bf16.mxu0 0
    %1210 = vmatpush1.bf16.msra.mxu0 0
    %1211 = vmatprep.subr.bf16.mxu0 0
    %1212 = vmatpush1.bf16.msra.mxu0 0
    %1213 = vmatprep.subr.bf16.mxu0 0
    %1214 = vmatpush1.bf16.msra.mxu0 0
    %1215 = vmatprep.subr.bf16.mxu0 0
    %1216 = vmatpush1.bf16.msra.mxu0 0
    %1217 = vmatprep.mubr.bf16.mxu0 0
    %1218 = vmatmul.mubr.bf16.gmra.mrb[0].mxu0 %v1183
    %v1219 = vpop.f32.mrb[0].mxu0
    %v1220 = vadd.f32 %v1156, %v1219
    %v1221 = vpop.f32.mrb[0].mxu0
    %v1222 = vpop.f32.mrb[0].mxu0
    %v1223 = vadd.f32 %v1156, %v1222
    %v1224 = vpop.f32.mrb[0].mxu0
    %1225 = vdwg.mxu0
    %vm1226 = vcmp.gt.f32.partialorder %v1220, 0.0
    %vm1227 = vcmp.gt.f32.partialorder %v1223, 0.0
    %v1228 = vmul.f32 %v1220, 0.01
    %v1229 = vmul.f32 %v1223, 0.01
    %v1230 = vsel %vm1226, %v1220, %v1228
    %v1231 = vsel %vm1227, %v1223, %v1229
    %v1232 = vpack.c.bf16 %v1231, %v1230
    %v1233 = vld [vmem:[#allocation10] sm:$0xff]
    %v1234 = vld [vmem:[#allocation10 + $0x8] sm:$0xff]
    %v1235 = vld [vmem:[#allocation10 + $0x10] sm:$0xff]
    %v1236 = vld [vmem:[#allocation10 + $0x18] sm:$0xff]
    %v1237 = vld [vmem:[#allocation10 + $0x20] sm:$0xff]
    %v1238 = vld [vmem:[#allocation10 + $0x28] sm:$0xff]
    %v1239 = vld [vmem:[#allocation10 + $0x30] sm:$0xff]
    %v1240 = vld [vmem:[#allocation10 + $0x38] sm:$0xff]
    %v1241 = vld [vmem:[#allocation10 + $0x40] sm:$0xff]
    %v1242 = vld [vmem:[#allocation10 + $0x48] sm:$0xff]
    %v1243 = vld [vmem:[#allocation10 + $0x50] sm:$0xff]
    %v1244 = vld [vmem:[#allocation10 + $0x58] sm:$0xff]
    %v1245 = vld [vmem:[#allocation10 + $0x60] sm:$0xff]
    %v1246 = vld [vmem:[#allocation10 + $0x68] sm:$0xff]
    %v1247 = vld [vmem:[#allocation10 + $0x70] sm:$0xff]
    %v1248 = vld [vmem:[#allocation10 + $0x78] sm:$0xff]
    %v1249 = vld [vmem:[#allocation10 + $0x80] sm:$0xff]
    %v1250 = vld [vmem:[#allocation10 + $0x88] sm:$0xff]
    %v1251 = vld [vmem:[#allocation10 + $0x90] sm:$0xff]
    %v1252 = vld [vmem:[#allocation10 + $0x98] sm:$0xff]
    %v1253 = vld [vmem:[#allocation10 + $0xa0] sm:$0xff]
    %v1254 = vld [vmem:[#allocation10 + $0xa8] sm:$0xff]
    %v1255 = vld [vmem:[#allocation10 + $0xb0] sm:$0xff]
    %v1256 = vld [vmem:[#allocation10 + $0xb8] sm:$0xff]
    %v1257 = vld [vmem:[#allocation10 + $0xc0] sm:$0xff]
    %v1258 = vld [vmem:[#allocation10 + $0xc8] sm:$0xff]
    %v1259 = vld [vmem:[#allocation10 + $0xd0] sm:$0xff]
    %v1260 = vld [vmem:[#allocation10 + $0xd8] sm:$0xff]
    %v1261 = vld [vmem:[#allocation10 + $0xe0] sm:$0xff]
    %v1262 = vld [vmem:[#allocation10 + $0xe8] sm:$0xff]
    %v1263 = vld [vmem:[#allocation10 + $0xf0] sm:$0xff]
    %v1264 = vld [vmem:[#allocation10 + $0xf8] sm:$0xff]
    %v1265 = vld [vmem:[#allocation10 + $0x100] sm:$0xff]
    %v1266 = vld [vmem:[#allocation10 + $0x108] sm:$0xff]
    %v1267 = vld [vmem:[#allocation10 + $0x110] sm:$0xff]
    %v1268 = vld [vmem:[#allocation10 + $0x118] sm:$0xff]
    %v1269 = vld [vmem:[#allocation10 + $0x120] sm:$0xff]
    %v1270 = vld [vmem:[#allocation10 + $0x128] sm:$0xff]
    %v1271 = vld [vmem:[#allocation10 + $0x130] sm:$0xff]
    %v1272 = vld [vmem:[#allocation10 + $0x138] sm:$0xff]
    %v1273 = vld [vmem:[#allocation10 + $0x140] sm:$0xff]
    %v1274 = vld [vmem:[#allocation10 + $0x148] sm:$0xff]
    %v1275 = vld [vmem:[#allocation10 + $0x150] sm:$0xff]
    %v1276 = vld [vmem:[#allocation10 + $0x158] sm:$0xff]
    %v1277 = vld [vmem:[#allocation10 + $0x160] sm:$0xff]
    %v1278 = vld [vmem:[#allocation10 + $0x168] sm:$0xff]
    %v1279 = vld [vmem:[#allocation10 + $0x170] sm:$0xff]
    %v1280 = vld [vmem:[#allocation10 + $0x178] sm:$0xff]
    %v1281 = vld [vmem:[#allocation10 + $0x180] sm:$0xff]
    %v1282 = vld [vmem:[#allocation10 + $0x188] sm:$0xff]
    %v1283 = vld [vmem:[#allocation10 + $0x190] sm:$0xff]
    %v1284 = vld [vmem:[#allocation10 + $0x198] sm:$0xff]
    %v1285 = vld [vmem:[#allocation10 + $0x1a0] sm:$0xff]
    %v1286 = vld [vmem:[#allocation10 + $0x1a8] sm:$0xff]
    %v1287 = vld [vmem:[#allocation10 + $0x1b0] sm:$0xff]
    %v1288 = vld [vmem:[#allocation10 + $0x1b8] sm:$0xff]
    %v1289 = vld [vmem:[#allocation10 + $0x1c0] sm:$0xff]
    %v1290 = vld [vmem:[#allocation10 + $0x1c8] sm:$0xff]
    %v1291 = vld [vmem:[#allocation10 + $0x1d0] sm:$0xff]
    %v1292 = vld [vmem:[#allocation10 + $0x1d8] sm:$0xff]
    %v1293 = vld [vmem:[#allocation10 + $0x1e0] sm:$0xff]
    %v1294 = vld [vmem:[#allocation10 + $0x1e8] sm:$0xff]
    %v1295 = vld [vmem:[#allocation10 + $0x1f0] sm:$0xff]
    %v1296 = vld [vmem:[#allocation10 + $0x1f8] sm:$0xff]
    %v1297 = vld [vmem:[%s13] sm:$0xff]
    %v1299 = vlaneseq
    %v1300 = vshrl.u32 %v1299, 7
    %v1301 = vsub.s32 0, %v1300
    %v1302 = vrot.slane %v1297, %v1301
    %v1303 = vlaneseq
    %v1304 = vshrl.u32 %v1303, 7
    %v1305 = vsub.s32 1, %v1304
    %v1306 = vrot.slane %v1297, %v1305
    %v1307 = vlaneseq
    %v1308 = vshrl.u32 %v1307, 7
    %v1309 = vsub.s32 2, %v1308
    %v1310 = vrot.slane %v1297, %v1309
    %v1311 = vlaneseq
    %v1312 = vshrl.u32 %v1311, 7
    %v1313 = vsub.s32 3, %v1312
    %v1314 = vrot.slane %v1297, %v1313
    %v1315 = vlaneseq
    %v1316 = vshrl.u32 %v1315, 7
    %v1317 = vsub.s32 4, %v1316
    %v1318 = vrot.slane %v1297, %v1317
    %v1319 = vlaneseq
    %v1320 = vshrl.u32 %v1319, 7
    %v1321 = vsub.s32 5, %v1320
    %v1322 = vrot.slane %v1297, %v1321
    %v1323 = vlaneseq
    %v1324 = vshrl.u32 %v1323, 7
    %v1325 = vsub.s32 6, %v1324
    %v1326 = vrot.slane %v1297, %v1325
    %v1327 = vlaneseq
    %v1328 = vshrl.u32 %v1327, 7
    %v1329 = vsub.s32 7, %v1328
    %v1330 = vrot.slane %v1297, %v1329
    %v1403 = vunpack.c.l.b16 %v1233
    %v1404 = vunpack.c.h.b16 %v1233
    %v1405 = vunpack.c.l.b16 %v1234
    %v1406 = vunpack.c.h.b16 %v1234
    %v1407 = vunpack.c.l.b16 %v1235
    %v1408 = vunpack.c.h.b16 %v1235
    %v1409 = vunpack.c.l.b16 %v1236
    %v1410 = vunpack.c.h.b16 %v1236
    %v1411 = vunpack.c.l.b16 %v1237
    %v1412 = vunpack.c.h.b16 %v1237
    %v1413 = vunpack.c.l.b16 %v1238
    %v1414 = vunpack.c.h.b16 %v1238
    %v1415 = vunpack.c.l.b16 %v1239
    %v1416 = vunpack.c.h.b16 %v1239
    %v1417 = vunpack.c.l.b16 %v1240
    %v1418 = vunpack.c.h.b16 %v1240
    %v1419 = vunpack.c.l.b16 %v1241
    %v1420 = vunpack.c.h.b16 %v1241
    %v1421 = vunpack.c.l.b16 %v1242
    %v1422 = vunpack.c.h.b16 %v1242
    %v1423 = vunpack.c.l.b16 %v1243
    %v1424 = vunpack.c.h.b16 %v1243
    %v1425 = vunpack.c.l.b16 %v1244
    %v1426 = vunpack.c.h.b16 %v1244
    %v1427 = vunpack.c.l.b16 %v1245
    %v1428 = vunpack.c.h.b16 %v1245
    %v1429 = vunpack.c.l.b16 %v1246
    %v1430 = vunpack.c.h.b16 %v1246
    %v1431 = vunpack.c.l.b16 %v1247
    %v1432 = vunpack.c.h.b16 %v1247
    %v1433 = vunpack.c.l.b16 %v1248
    %v1434 = vunpack.c.h.b16 %v1248
    %v1435 = vunpack.c.l.b16 %v1249
    %v1436 = vunpack.c.h.b16 %v1249
    %v1437 = vunpack.c.l.b16 %v1250
    %v1438 = vunpack.c.h.b16 %v1250
    %v1439 = vunpack.c.l.b16 %v1251
    %v1440 = vunpack.c.h.b16 %v1251
    %v1441 = vunpack.c.l.b16 %v1252
    %v1442 = vunpack.c.h.b16 %v1252
    %v1443 = vunpack.c.l.b16 %v1253
    %v1444 = vunpack.c.h.b16 %v1253
    %v1445 = vunpack.c.l.b16 %v1254
    %v1446 = vunpack.c.h.b16 %v1254
    %v1447 = vunpack.c.l.b16 %v1255
    %v1448 = vunpack.c.h.b16 %v1255
    %v1449 = vunpack.c.l.b16 %v1256
    %v1450 = vunpack.c.h.b16 %v1256
    %v1451 = vunpack.c.l.b16 %v1257
    %v1452 = vunpack.c.h.b16 %v1257
    %v1453 = vunpack.c.l.b16 %v1258
    %v1454 = vunpack.c.h.b16 %v1258
    %v1455 = vunpack.c.l.b16 %v1259
    %v1456 = vunpack.c.h.b16 %v1259
    %v1457 = vunpack.c.l.b16 %v1260
    %v1458 = vunpack.c.h.b16 %v1260
    %v1459 = vunpack.c.l.b16 %v1261
    %v1460 = vunpack.c.h.b16 %v1261
    %v1461 = vunpack.c.l.b16 %v1262
    %v1462 = vunpack.c.h.b16 %v1262
    %v1463 = vunpack.c.l.b16 %v1263
    %v1464 = vunpack.c.h.b16 %v1263
    %v1465 = vunpack.c.l.b16 %v1264
    %v1466 = vunpack.c.h.b16 %v1264
    %v1467 = vunpack.c.l.b16 %v1265
    %v1468 = vunpack.c.h.b16 %v1265
    %v1469 = vunpack.c.l.b16 %v1266
    %v1470 = vunpack.c.h.b16 %v1266
    %v1471 = vunpack.c.l.b16 %v1267
    %v1472 = vunpack.c.h.b16 %v1267
    %v1473 = vunpack.c.l.b16 %v1268
    %v1474 = vunpack.c.h.b16 %v1268
    %v1475 = vunpack.c.l.b16 %v1269
    %v1476 = vunpack.c.h.b16 %v1269
    %v1477 = vunpack.c.l.b16 %v1270
    %v1478 = vunpack.c.h.b16 %v1270
    %v1479 = vunpack.c.l.b16 %v1271
    %v1480 = vunpack.c.h.b16 %v1271
    %v1481 = vunpack.c.l.b16 %v1272
    %v1482 = vunpack.c.h.b16 %v1272
    %v1483 = vunpack.c.l.b16 %v1273
    %v1484 = vunpack.c.h.b16 %v1273
    %v1485 = vunpack.c.l.b16 %v1274
    %v1486 = vunpack.c.h.b16 %v1274
    %v1487 = vunpack.c.l.b16 %v1275
    %v1488 = vunpack.c.h.b16 %v1275
    %v1489 = vunpack.c.l.b16 %v1276
    %v1490 = vunpack.c.h.b16 %v1276
    %v1491 = vunpack.c.l.b16 %v1277
    %v1492 = vunpack.c.h.b16 %v1277
    %v1493 = vunpack.c.l.b16 %v1278
    %v1494 = vunpack.c.h.b16 %v1278
    %v1495 = vunpack.c.l.b16 %v1279
    %v1496 = vunpack.c.h.b16 %v1279
    %v1497 = vunpack.c.l.b16 %v1280
    %v1498 = vunpack.c.h.b16 %v1280
    %v1499 = vunpack.c.l.b16 %v1281
    %v1500 = vunpack.c.h.b16 %v1281
    %v1501 = vunpack.c.l.b16 %v1282
    %v1502 = vunpack.c.h.b16 %v1282
    %v1503 = vunpack.c.l.b16 %v1283
    %v1504 = vunpack.c.h.b16 %v1283
    %v1505 = vunpack.c.l.b16 %v1284
    %v1506 = vunpack.c.h.b16 %v1284
    %v1507 = vunpack.c.l.b16 %v1285
    %v1508 = vunpack.c.h.b16 %v1285
    %v1509 = vunpack.c.l.b16 %v1286
    %v1510 = vunpack.c.h.b16 %v1286
    %v1511 = vunpack.c.l.b16 %v1287
    %v1512 = vunpack.c.h.b16 %v1287
    %v1513 = vunpack.c.l.b16 %v1288
    %v1514 = vunpack.c.h.b16 %v1288
    %v1515 = vunpack.c.l.b16 %v1289
    %v1516 = vunpack.c.h.b16 %v1289
    %v1517 = vunpack.c.l.b16 %v1290
    %v1518 = vunpack.c.h.b16 %v1290
    %v1519 = vunpack.c.l.b16 %v1291
    %v1520 = vunpack.c.h.b16 %v1291
    %v1521 = vunpack.c.l.b16 %v1292
    %v1522 = vunpack.c.h.b16 %v1292
    %v1523 = vunpack.c.l.b16 %v1293
    %v1524 = vunpack.c.h.b16 %v1293
    %v1525 = vunpack.c.l.b16 %v1294
    %v1526 = vunpack.c.h.b16 %v1294
    %v1527 = vunpack.c.l.b16 %v1295
    %v1528 = vunpack.c.h.b16 %v1295
    %v1529 = vunpack.c.l.b16 %v1296
    %v1530 = vunpack.c.h.b16 %v1296
    %v1531 = vpack.c.b16 %v1411, %v1403
    %v1532 = vpack.c.b16 %v1412, %v1404
    %v1533 = vpack.c.b16 %v1413, %v1405
    %v1534 = vpack.c.b16 %v1414, %v1406
    %v1535 = vpack.c.b16 %v1415, %v1407
    %v1536 = vpack.c.b16 %v1416, %v1408
    %v1537 = vpack.c.b16 %v1417, %v1409
    %v1538 = vpack.c.b16 %v1418, %v1410
    %v1539 = vpack.c.b16 %v1427, %v1419
    %v1540 = vpack.c.b16 %v1428, %v1420
    %v1541 = vpack.c.b16 %v1429, %v1421
    %v1542 = vpack.c.b16 %v1430, %v1422
    %v1543 = vpack.c.b16 %v1431, %v1423
    %v1544 = vpack.c.b16 %v1432, %v1424
    %v1545 = vpack.c.b16 %v1433, %v1425
    %v1546 = vpack.c.b16 %v1434, %v1426
    %v1547 = vpack.c.b16 %v1443, %v1435
    %v1548 = vpack.c.b16 %v1444, %v1436
    %v1549 = vpack.c.b16 %v1445, %v1437
    %v1550 = vpack.c.b16 %v1446, %v1438
    %v1551 = vpack.c.b16 %v1447, %v1439
    %v1552 = vpack.c.b16 %v1448, %v1440
    %v1553 = vpack.c.b16 %v1449, %v1441
    %v1554 = vpack.c.b16 %v1450, %v1442
    %v1555 = vpack.c.b16 %v1459, %v1451
    %v1556 = vpack.c.b16 %v1460, %v1452
    %v1557 = vpack.c.b16 %v1461, %v1453
    %v1558 = vpack.c.b16 %v1462, %v1454
    %v1559 = vpack.c.b16 %v1463, %v1455
    %v1560 = vpack.c.b16 %v1464, %v1456
    %v1561 = vpack.c.b16 %v1465, %v1457
    %v1562 = vpack.c.b16 %v1466, %v1458
    %v1563 = vpack.c.b16 %v1475, %v1467
    %v1564 = vpack.c.b16 %v1476, %v1468
    %v1565 = vpack.c.b16 %v1477, %v1469
    %v1566 = vpack.c.b16 %v1478, %v1470
    %v1567 = vpack.c.b16 %v1479, %v1471
    %v1568 = vpack.c.b16 %v1480, %v1472
    %v1569 = vpack.c.b16 %v1481, %v1473
    %v1570 = vpack.c.b16 %v1482, %v1474
    %v1571 = vpack.c.b16 %v1491, %v1483
    %v1572 = vpack.c.b16 %v1492, %v1484
    %v1573 = vpack.c.b16 %v1493, %v1485
    %v1574 = vpack.c.b16 %v1494, %v1486
    %v1575 = vpack.c.b16 %v1495, %v1487
    %v1576 = vpack.c.b16 %v1496, %v1488
    %v1577 = vpack.c.b16 %v1497, %v1489
    %v1578 = vpack.c.b16 %v1498, %v1490
    %v1579 = vpack.c.b16 %v1507, %v1499
    %v1580 = vpack.c.b16 %v1508, %v1500
    %v1581 = vpack.c.b16 %v1509, %v1501
    %v1582 = vpack.c.b16 %v1510, %v1502
    %v1583 = vpack.c.b16 %v1511, %v1503
    %v1584 = vpack.c.b16 %v1512, %v1504
    %v1585 = vpack.c.b16 %v1513, %v1505
    %v1586 = vpack.c.b16 %v1514, %v1506
    %v1587 = vpack.c.b16 %v1523, %v1515
    %v1588 = vpack.c.b16 %v1524, %v1516
    %v1589 = vpack.c.b16 %v1525, %v1517
    %v1590 = vpack.c.b16 %v1526, %v1518
    %v1591 = vpack.c.b16 %v1527, %v1519
    %v1592 = vpack.c.b16 %v1528, %v1520
    %v1593 = vpack.c.b16 %v1529, %v1521
    %v1594 = vpack.c.b16 %v1530, %v1522
    %1659 = vmatprep.subr.bf16.mxu0 %v1532
    %1660 = vmatpush1.bf16.msra.mxu0 %v1531
    %1661 = vmatprep.subr.bf16.mxu0 %v1540
    %1662 = vmatpush1.bf16.msra.mxu0 %v1539
    %1663 = vmatprep.subr.bf16.mxu0 %v1548
    %1664 = vmatpush1.bf16.msra.mxu0 %v1547
    %1665 = vmatprep.subr.bf16.mxu0 %v1556
    %1666 = vmatpush1.bf16.msra.mxu0 %v1555
    %1667 = vmatprep.subr.bf16.mxu0 %v1564
    %1668 = vmatpush1.bf16.msra.mxu0 %v1563
    %1669 = vmatprep.subr.bf16.mxu0 %v1572
    %1670 = vmatpush1.bf16.msra.mxu0 %v1571
    %1671 = vmatprep.subr.bf16.mxu0 %v1580
    %1672 = vmatpush1.bf16.msra.mxu0 %v1579
    %1673 = vmatprep.subr.bf16.mxu0 %v1588
    %1674 = vmatpush1.bf16.msra.mxu0 %v1587
    %1675 = vmatprep.subr.bf16.mxu0 0
    %1676 = vmatpush1.bf16.msra.mxu0 0
    %1677 = vmatprep.subr.bf16.mxu0 0
    %1678 = vmatpush1.bf16.msra.mxu0 0
    %1679 = vmatprep.subr.bf16.mxu0 0
    %1680 = vmatpush1.bf16.msra.mxu0 0
    %1681 = vmatprep.subr.bf16.mxu0 0
    %1682 = vmatpush1.bf16.msra.mxu0 0
    %1683 = vmatprep.subr.bf16.mxu0 0
    %1684 = vmatpush1.bf16.msra.mxu0 0
    %1685 = vmatprep.subr.bf16.mxu0 0
    %1686 = vmatpush1.bf16.msra.mxu0 0
    %1687 = vmatprep.subr.bf16.mxu0 0
    %1688 = vmatpush1.bf16.msra.mxu0 0
    %1689 = vmatprep.subr.bf16.mxu0 0
    %1690 = vmatpush1.bf16.msra.mxu0 0
    %1691 = vmatprep.mubr.bf16.mxu0 0
    %1692 = vmatmul.mubr.bf16.gmra.mrb[0].mxu0 %v1232
    %v1693 = vpop.f32.mrb[0].mxu0
    %v1694 = vadd.f32 %v1302, %v1693
    %v1695 = vpop.f32.mrb[0].mxu0
    %v1696 = vadd.f32 %v1306, %v1695
    %v1697 = vpop.f32.mrb[0].mxu0
    %v1698 = vadd.f32 %v1302, %v1697
    %v1699 = vpop.f32.mrb[0].mxu0
    %v1700 = vadd.f32 %v1306, %v1699
    %1701 = vdwg.mxu0
    %1702 = vmatprep.subr.bf16.mxu0 %v1534
    %1703 = vmatpush1.bf16.msra.mxu0 %v1533
    %1704 = vmatprep.subr.bf16.mxu0 %v1542
    %1705 = vmatpush1.bf16.msra.mxu0 %v1541
    %1706 = vmatprep.subr.bf16.mxu0 %v1550
    %1707 = vmatpush1.bf16.msra.mxu0 %v1549
    %1708 = vmatprep.subr.bf16.mxu0 %v1558
    %1709 = vmatpush1.bf16.msra.mxu0 %v1557
    %1710 = vmatprep.subr.bf16.mxu0 %v1566
    %1711 = vmatpush1.bf16.msra.mxu0 %v1565
    %1712 = vmatprep.subr.bf16.mxu0 %v1574
    %1713 = vmatpush1.bf16.msra.mxu0 %v1573
    %1714 = vmatprep.subr.bf16.mxu0 %v1582
    %1715 = vmatpush1.bf16.msra.mxu0 %v1581
    %1716 = vmatprep.subr.bf16.mxu0 %v1590
    %1717 = vmatpush1.bf16.msra.mxu0 %v1589
    %1718 = vmatprep.subr.bf16.mxu0 0
    %1719 = vmatpush1.bf16.msra.mxu0 0
    %1720 = vmatprep.subr.bf16.mxu0 0
    %1721 = vmatpush1.bf16.msra.mxu0 0
    %1722 = vmatprep.subr.bf16.mxu0 0
    %1723 = vmatpush1.bf16.msra.mxu0 0
    %1724 = vmatprep.subr.bf16.mxu0 0
    %1725 = vmatpush1.bf16.msra.mxu0 0
    %1726 = vmatprep.subr.bf16.mxu0 0
    %1727 = vmatpush1.bf16.msra.mxu0 0
    %1728 = vmatprep.subr.bf16.mxu0 0
    %1729 = vmatpush1.bf16.msra.mxu0 0
    %1730 = vmatprep.subr.bf16.mxu0 0
    %1731 = vmatpush1.bf16.msra.mxu0 0
    %1732 = vmatprep.subr.bf16.mxu0 0
    %1733 = vmatpush1.bf16.msra.mxu0 0
    %1734 = vmatprep.mubr.bf16.mxu0 0
    %1735 = vmatmul.mubr.bf16.gmra.mrb[0].mxu0 %v1232
    %v1736 = vpop.f32.mrb[0].mxu0
    %v1737 = vadd.f32 %v1310, %v1736
    %v1738 = vpop.f32.mrb[0].mxu0
    %v1739 = vadd.f32 %v1314, %v1738
    %v1740 = vpop.f32.mrb[0].mxu0
    %v1741 = vadd.f32 %v1310, %v1740
    %v1742 = vpop.f32.mrb[0].mxu0
    %v1743 = vadd.f32 %v1314, %v1742
    %1744 = vdwg.mxu0
    %1745 = vmatprep.subr.bf16.mxu0 %v1536
    %1746 = vmatpush1.bf16.msra.mxu0 %v1535
    %1747 = vmatprep.subr.bf16.mxu0 %v1544
    %1748 = vmatpush1.bf16.msra.mxu0 %v1543
    %1749 = vmatprep.subr.bf16.mxu0 %v1552
    %1750 = vmatpush1.bf16.msra.mxu0 %v1551
    %1751 = vmatprep.subr.bf16.mxu0 %v1560
    %1752 = vmatpush1.bf16.msra.mxu0 %v1559
    %1753 = vmatprep.subr.bf16.mxu0 %v1568
    %1754 = vmatpush1.bf16.msra.mxu0 %v1567
    %1755 = vmatprep.subr.bf16.mxu0 %v1576
    %1756 = vmatpush1.bf16.msra.mxu0 %v1575
    %1757 = vmatprep.subr.bf16.mxu0 %v1584
    %1758 = vmatpush1.bf16.msra.mxu0 %v1583
    %1759 = vmatprep.subr.bf16.mxu0 %v1592
    %1760 = vmatpush1.bf16.msra.mxu0 %v1591
    %1761 = vmatprep.subr.bf16.mxu0 0
    %1762 = vmatpush1.bf16.msra.mxu0 0
    %1763 = vmatprep.subr.bf16.mxu0 0
    %1764 = vmatpush1.bf16.msra.mxu0 0
    %1765 = vmatprep.subr.bf16.mxu0 0
    %1766 = vmatpush1.bf16.msra.mxu0 0
    %1767 = vmatprep.subr.bf16.mxu0 0
    %1768 = vmatpush1.bf16.msra.mxu0 0
    %1769 = vmatprep.subr.bf16.mxu0 0
    %1770 = vmatpush1.bf16.msra.mxu0 0
    %1771 = vmatprep.subr.bf16.mxu0 0
    %1772 = vmatpush1.bf16.msra.mxu0 0
    %1773 = vmatprep.subr.bf16.mxu0 0
    %1774 = vmatpush1.bf16.msra.mxu0 0
    %1775 = vmatprep.subr.bf16.mxu0 0
    %1776 = vmatpush1.bf16.msra.mxu0 0
    %1777 = vmatprep.mubr.bf16.mxu0 0
    %1778 = vmatmul.mubr.bf16.gmra.mrb[0].mxu0 %v1232
    %v1779 = vpop.f32.mrb[0].mxu0
    %v1780 = vadd.f32 %v1318, %v1779
    %v1781 = vpop.f32.mrb[0].mxu0
    %v1782 = vadd.f32 %v1322, %v1781
    %v1783 = vpop.f32.mrb[0].mxu0
    %v1784 = vadd.f32 %v1318, %v1783
    %v1785 = vpop.f32.mrb[0].mxu0
    %v1786 = vadd.f32 %v1322, %v1785
    %1787 = vdwg.mxu0
    %1788 = vmatprep.subr.bf16.mxu0 %v1538
    %1789 = vmatpush1.bf16.msra.mxu0 %v1537
    %1790 = vmatprep.subr.bf16.mxu0 %v1546
    %1791 = vmatpush1.bf16.msra.mxu0 %v1545
    %1792 = vmatprep.subr.bf16.mxu0 %v1554
    %1793 = vmatpush1.bf16.msra.mxu0 %v1553
    %1794 = vmatprep.subr.bf16.mxu0 %v1562
    %1795 = vmatpush1.bf16.msra.mxu0 %v1561
    %1796 = vmatprep.subr.bf16.mxu0 %v1570
    %1797 = vmatpush1.bf16.msra.mxu0 %v1569
    %1798 = vmatprep.subr.bf16.mxu0 %v1578
    %1799 = vmatpush1.bf16.msra.mxu0 %v1577
    %1800 = vmatprep.subr.bf16.mxu0 %v1586
    %1801 = vmatpush1.bf16.msra.mxu0 %v1585
    %1802 = vmatprep.subr.bf16.mxu0 %v1594
    %1803 = vmatpush1.bf16.msra.mxu0 %v1593
    %1804 = vmatprep.subr.bf16.mxu0 0
    %1805 = vmatpush1.bf16.msra.mxu0 0
    %1806 = vmatprep.subr.bf16.mxu0 0
    %1807 = vmatpush1.bf16.msra.mxu0 0
    %1808 = vmatprep.subr.bf16.mxu0 0
    %1809 = vmatpush1.bf16.msra.mxu0 0
    %1810 = vmatprep.subr.bf16.mxu0 0
    %1811 = vmatpush1.bf16.msra.mxu0 0
    %1812 = vmatprep.subr.bf16.mxu0 0
    %1813 = vmatpush1.bf16.msra.mxu0 0
    %1814 = vmatprep.subr.bf16.mxu0 0
    %1815 = vmatpush1.bf16.msra.mxu0 0
    %1816 = vmatprep.subr.bf16.mxu0 0
    %1817 = vmatpush1.bf16.msra.mxu0 0
    %1818 = vmatprep.subr.bf16.mxu0 0
    %1819 = vmatpush1.bf16.msra.mxu0 0
    %1820 = vmatprep.mubr.bf16.mxu0 0
    %1821 = vmatmul.mubr.bf16.gmra.mrb[0].mxu0 %v1232
    %v1822 = vpop.f32.mrb[0].mxu0
    %v1823 = vadd.f32 %v1326, %v1822
    %v1824 = vpop.f32.mrb[0].mxu0
    %v1825 = vadd.f32 %v1330, %v1824
    %v1826 = vpop.f32.mrb[0].mxu0
    %v1827 = vadd.f32 %v1326, %v1826
    %v1828 = vpop.f32.mrb[0].mxu0
    %v1829 = vadd.f32 %v1330, %v1828
    %1830 = vdwg.mxu0
    %v1831 = vtanh.pop %v1694
    %v1832 = vtanh.pop %v1696
    %v1833 = vtanh.pop %v1737
    %v1834 = vtanh.pop %v1739
    %v1835 = vtanh.pop %v1780
    %v1836 = vtanh.pop %v1782
    %v1837 = vtanh.pop %v1823
    %v1838 = vtanh.pop %v1825
    %v1839 = vtanh.pop %v1698
    %v1840 = vtanh.pop %v1700
    %v1841 = vtanh.pop %v1741
    %v1842 = vtanh.pop %v1743
    %v1843 = vtanh.pop %v1784
    %v1844 = vtanh.pop %v1786
    %v1845 = vtanh.pop %v1827
    %v1846 = vtanh.pop %v1829
    %v1847 = vpack.c.bf16 %v1839, %v1831
    %v1848 = vpack.c.bf16 %v1840, %v1832
    %v1849 = vpack.c.bf16 %v1841, %v1833
    %v1850 = vpack.c.bf16 %v1842, %v1834
    %v1851 = vpack.c.bf16 %v1843, %v1835
    %v1852 = vpack.c.bf16 %v1844, %v1836
    %v1853 = vpack.c.bf16 %v1845, %v1837
    %v1854 = vpack.c.bf16 %v1846, %v1838
    %v1863 = vunpack.c.l.b16 %v1847
    %v1864 = vunpack.c.l.b16 %v1848
    %v1865 = vunpack.c.l.b16 %v1849
    %v1866 = vunpack.c.l.b16 %v1850
    %v1867 = vunpack.c.l.b16 %v1851
    %v1868 = vunpack.c.l.b16 %v1852
    %v1869 = vunpack.c.l.b16 %v1853
    %v1870 = vunpack.c.l.b16 %v1854
    %v1871 = vunpack.c.h.b16 %v1847
    %v1872 = vunpack.c.h.b16 %v1848
    %v1873 = vunpack.c.h.b16 %v1849
    %v1874 = vunpack.c.h.b16 %v1850
    %v1875 = vunpack.c.h.b16 %v1851
    %v1876 = vunpack.c.h.b16 %v1852
    %v1877 = vunpack.c.h.b16 %v1853
    %v1878 = vunpack.c.h.b16 %v1854
    %v1879 = vpack.c.b16 %v1864, %v1863
    %v1880 = vpack.c.b16 %v1866, %v1865
    %v1881 = vpack.c.b16 %v1868, %v1867
    %v1882 = vpack.c.b16 %v1870, %v1869
    %v1883 = vpack.c.b16 %v1872, %v1871
    %v1884 = vpack.c.b16 %v1874, %v1873
    %v1885 = vpack.c.b16 %v1876, %v1875
    %v1886 = vpack.c.b16 %v1878, %v1877
    %1895 = vst [vmem:[#allocation11] sm:$0xff] %v1879
    %1896 = vst [vmem:[#allocation11 + $0x8] sm:$0xff] %v1880
    %1897 = vst [vmem:[#allocation11 + $0x10] sm:$0xff] %v1881
    %1898 = vst [vmem:[#allocation11 + $0x18] sm:$0xff] %v1882
    %1899 = vst [vmem:[#allocation11 + $0x20] sm:$0xff] %v1883
    %1900 = vst [vmem:[#allocation11 + $0x28] sm:$0xff] %v1884
    %1901 = vst [vmem:[#allocation11 + $0x30] sm:$0xff] %v1885
    %1902 = vst [vmem:[#allocation11 + $0x38] sm:$0xff] %v1886
    %1903 = vst [vmem:[#allocation12] sm:$0xff] %v1039
    %1904 = vst [vmem:[#allocation12 + $0x8] sm:$0xff] %v1044
    // Predicated region
    $region78: #{tpu_custom_call.1} parent=1 // pred_check
      _
    $region79: #{tpu_custom_call.1} parent=1 // pred_check_branch
      %1906 = sbr.rel (0) target = $region81
    $region80: #{tpu_custom_call.1} parent=1 // pred_region
      %s1908 = ssub.s32 1024, 1024
      %1909 = vsyncadd [#allocation4], %s1908
      %s1910 = sshll.u32 [#allocation11], 4
      %s1911 = int_to_ptr.vmem [resolvable:$true] %s1910
      %1916 = dma.vmem_to_hbm [thread:$0]  %s1911, 1024, %s14, [#allocation4], 512, 512, 32
    $region81: #{tpu_custom_call.1} parent=1 // pred_fallthru
      _
    // Predicated region
    $region82: #{tpu_custom_call.1} parent=1 // pred_check
      _
    $region83: #{tpu_custom_call.1} parent=1 // pred_check_branch
      %1918 = sbr.rel (0) target = $region85
    $region84: #{tpu_custom_call.1} parent=1 // pred_region
      %s1920 = ssub.s32 256, 256
      %1921 = vsyncadd [#allocation13], %s1920
      %s1922 = sshll.u32 [#allocation12], 4
      %s1923 = int_to_ptr.vmem [resolvable:$true] %s1922
      %1928 = dma.vmem_to_hbm [thread:$0]  %s1923, 256, %s15, [#allocation13], 128, 128, 8
    $region85: #{tpu_custom_call.1} parent=1 // pred_fallthru
      _
    // Predicated region
    $region86: #{tpu_custom_call.1} parent=1 // pred_check
      _
    $region87: #{tpu_custom_call.1} parent=1 // pred_check_branch
      %1930 = sbr.rel (0) target = $region89
    $region88: #{tpu_custom_call.1} parent=1 // pred_region
      %1931 = dma.done [#allocation4], 1024
    $region89: #{tpu_custom_call.1} parent=1 // pred_fallthru
      _
    // Predicated region
    $region90: #{tpu_custom_call.1} parent=1 // pred_check
      _
    $region91: #{tpu_custom_call.1} parent=1 // pred_check_branch
      %1933 = sbr.rel (0) target = $region93
    $region92: #{tpu_custom_call.1} parent=1 // pred_region
      %1934 = dma.done [#allocation13], 256
    $region93: #{tpu_custom_call.1} parent=1 // pred_fallthru
      _
    %1935 = vsyncpa [#allocation3], 1
    %1936 = vsyncpa [#allocation6], 1
    %1937 = vsyncpa [#allocation9], 1
    %1938 = vsyncpa [#allocation4], 1
    %1939 = vsyncpa [#allocation13], 1

</llo_original>
